<compile_context>
chip_gen: v5e
topology: v5e:2x2
jax: 0.10.0
libtpu: 0.0.40
codegen_flags: <defaults>
</compile_context>

<pallas_src>
import functools

import numpy as np
import jax
import jax.numpy as jnp
from jax import lax
from jax.experimental import pallas as pl
from jax.experimental.pallas import tpu as pltpu

EPS = 1e-5


# ----------------------------- Pallas kernel -----------------------------

def _residual_block_kernel(x_ref, w1_ref, g1_ref, b1_ref, w2_ref, g2_ref,
                           b2_ref, masks_ref, o_ref, *, H, W, C, eps):
    """One batch sample per grid step, channels-first (C, H*W) layout.

    x_ref    : (1, C, H*W)   input sample (lane dim = H*W, no padding anywhere)
    w*_ref   : (C, 9*C)      conv weights packed as (cout, (ky, kx, cin))
    g*/b*    : (C, 1)        InstanceNorm affine params
    masks_ref: (9, 1, H*W)   per-tap validity masks (1.0 inside, 0.0 at borders)
    o_ref    : (1, C, H*W)   output sample
    """
    HW = H * W
    x = x_ref[0]                                   # (C, HW)
    tap_masks = [masks_ref[t] for t in range(9)]   # nine (1, HW) constants

    def conv3x3(v, w_ref):
        # 3x3 / stride-1 / pad-1 conv as ONE MXU matmul with K = 9*C:
        # im2col built from lane rolls (XLU) + static border masks (VPU).
        taps = []
        for t in range(9):
            dy, dx = t // 3 - 1, t % 3 - 1          # tap offsets in {-1,0,1}
            s = dy * W + dx                          # flat-index shift
            r = v if s == 0 else pltpu.roll(v, shift=(-s) % HW, axis=1)
            taps.append(r * tap_masks[t])            # zero the wrapped border
        im = jnp.concatenate(taps, axis=0)           # (9*C, HW)
        return jnp.dot(w_ref[...], im,
                       preferred_element_type=jnp.float32)   # (C, HW)

    def instance_norm(v, g_ref, b_ref):
        # One-pass stats (biased variance, like PyTorch) + fused affine.
        m = jnp.mean(v, axis=1, keepdims=True)       # (C, 1)
        m2 = jnp.mean(v * v, axis=1, keepdims=True)  # (C, 1)
        var = m2 - m * m
        scale = g_ref[...] * lax.rsqrt(var + eps)    # (C, 1)
        shift = b_ref[...] - m * scale               # (C, 1)
        return v * scale + shift

    h = jnp.maximum(instance_norm(conv3x3(x, w1_ref), g1_ref, b1_ref), 0.0)
    y = instance_norm(conv3x3(h, w2_ref), g2_ref, b2_ref)
    o_ref[0] = x + y                                 # residual add, lane-dense store


# ------------------------------ wrapper ------------------------------

def residual_block_forward(params, x_nchw):
    """PyTorch-style NCHW in / NCHW out. Weights are OIHW like nn.Conv2d."""
    w1, g1, b1 = params["w1"], params["g1"], params["b1"]
    w2, g2, b2 = params["w2"], params["g2"], params["b2"]

    N, C, H, W = x_nchw.shape
    HW = H * W
    assert w1.shape == (C, C, 3, 3) and w2.shape == (C, C, 3, 3), \
        "ResidualBlock requires dim_in == dim_out"
    assert C % 8 == 0, "channel count must be a multiple of 8 (sublane tile)"
    assert HW % 128 == 0, "H*W must be a multiple of 128 (lane tile)"
    # TODO(synk): relax the alignment asserts with in-kernel padding if needed.

    # Free reshape: NCHW -> (N, C, H*W). No channel padding, no transpose.
    x = x_nchw.reshape(N, C, HW).astype(jnp.float32)

    def prep_w(w):
        # (cout, cin, ky, kx) -> (cout, (ky, kx, cin)): one K = 9*C contraction.
        return jnp.transpose(w.astype(jnp.float32), (0, 2, 3, 1)).reshape(C, 9 * C)

    def prep_v(v):
        return v.astype(jnp.float32).reshape(C, 1)

    w1p, w2p = prep_w(w1), prep_w(w2)
    g1p, b1p = prep_v(g1), prep_v(b1)
    g2p, b2p = prep_v(g2), prep_v(b2)

    # Static border-validity masks for the 9 taps (compile-time constants).
    rows = np.arange(H).reshape(H, 1)
    cols = np.arange(W).reshape(1, W)
    mask_list = []
    for ky in range(3):
        for kx in range(3):
            dy, dx = ky - 1, kx - 1
            m = ((rows + dy >= 0) & (rows + dy < H) &
                 (cols + dx >= 0) & (cols + dx < W))
            mask_list.append(m.reshape(-1))
    masks = jnp.asarray(np.stack(mask_list)[:, None, :].astype(np.float32))  # (9,1,HW)

    kern = functools.partial(_residual_block_kernel, H=H, W=W, C=C, eps=EPS)

    out = pl.pallas_call(
        kern,
        out_shape=jax.ShapeDtypeStruct((N, C, HW), jnp.float32),
        grid_spec=pltpu.PrefetchScalarGridSpec(
            num_scalar_prefetch=0,
            grid=(N,),
            in_specs=[
                pl.BlockSpec((1, C, HW), lambda n: (n, 0, 0)),     # x
                pl.BlockSpec((C, 9 * C), lambda n: (0, 0)),        # w1 packed
                pl.BlockSpec((C, 1), lambda n: (0, 0)),            # gamma1
                pl.BlockSpec((C, 1), lambda n: (0, 0)),            # beta1
                pl.BlockSpec((C, 9 * C), lambda n: (0, 0)),        # w2 packed
                pl.BlockSpec((C, 1), lambda n: (0, 0)),            # gamma2
                pl.BlockSpec((C, 1), lambda n: (0, 0)),            # beta2
                pl.BlockSpec((9, 1, HW), lambda n: (0, 0, 0)),     # tap masks
            ],
            out_specs=pl.BlockSpec((1, C, HW), lambda n: (n, 0, 0)),
        ),
        compiler_params=pltpu.CompilerParams(
            dimension_semantics=("parallel",),      # megacore-shardable batch axis
            vmem_limit_bytes=32 * 1024 * 1024,      # explicit, safe on v5e/v6e/v7x
        ),
    )(x, w1p, g1p, b1p, w2p, g2p, b2p, masks)

    return out.reshape(N, C, H, W)                   # free reshape back to NCHW


# --------------------------- pure-JAX reference ---------------------------

def reference_forward(params, x_nchw):
    x = x_nchw.astype(jnp.float32)

    def conv(v, w):
        return jax.lax.conv_general_dilated(
            v, w.astype(jnp.float32), window_strides=(1, 1),
            padding=((1, 1), (1, 1)),
            dimension_numbers=("NCHW", "OIHW", "NCHW"))

    def inorm(v, g, b):
        mean = jnp.mean(v, axis=(2, 3), keepdims=True)
        var = jnp.mean((v - mean) ** 2, axis=(2, 3), keepdims=True)
        vhat = (v - mean) * jax.lax.rsqrt(var + EPS)
        return vhat * g[None, :, None, None] + b[None, :, None, None]

    h = jnp.maximum(inorm(conv(x, params["w1"]), params["g1"], params["b1"]), 0.0)
    y = inorm(conv(h, params["w2"]), params["g2"], params["b2"])
    return x + y


# ------------------------------- driver -------------------------------

if __name__ == "__main__":
    key = jax.random.PRNGKey(0)
    kw1, kw2, kg1, kb1, kg2, kb2, kx = jax.random.split(key, 7)

    # Small shapes: batch=2, dim_in == dim_out == 32, 16x16 spatial (NCHW).
    N, C, H, W = 2, 32, 16, 16
    params = {
        "w1": 0.1 * jax.random.normal(kw1, (C, C, 3, 3), jnp.float32),  # OIHW
        "g1": 1.0 + 0.1 * jax.random.normal(kg1, (C,), jnp.float32),
        "b1": 0.1 * jax.random.normal(kb1, (C,), jnp.float32),
        "w2": 0.1 * jax.random.normal(kw2, (C, C, 3, 3), jnp.float32),
        "g2": 1.0 + 0.1 * jax.random.normal(kg2, (C,), jnp.float32),
        "b2": 0.1 * jax.random.normal(kb2, (C,), jnp.float32),
    }
    x = jax.random.normal(kx, (N, C, H, W), jnp.float32)

    out = jax.block_until_ready(jax.jit(residual_block_forward)(params, x))
    ref = jax.block_until_ready(reference_forward(params, x))

    assert out.shape == (N, C, H, W), out.shape
    assert bool(jnp.all(jnp.isfinite(out)))
    max_err = float(jnp.max(jnp.abs(out - ref)))
    assert max_err < 2e-3, f"max abs err {max_err}"
    print("KERNEL_OK")
</pallas_src>

<mosaic_0001>
module attributes {stable_mosaic.version = 11 : i64} {
  func.func @_residual_block_kernel(%arg0: i32, %arg1: memref<1x32x256xf32, #tpu.memory_space<vmem>>, %arg2: memref<32x288xf32, #tpu.memory_space<vmem>>, %arg3: memref<32x1xf32, #tpu.memory_space<vmem>>, %arg4: memref<32x1xf32, #tpu.memory_space<vmem>>, %arg5: memref<32x288xf32, #tpu.memory_space<vmem>>, %arg6: memref<32x1xf32, #tpu.memory_space<vmem>>, %arg7: memref<32x1xf32, #tpu.memory_space<vmem>>, %arg8: memref<9x1x256xf32, #tpu.memory_space<vmem>>, %arg9: memref<1x32x256xf32, #tpu.memory_space<vmem>>) attributes {dimension_semantics = [#tpu.dimension_semantics<parallel>], iteration_bounds = array<i64: 2>, scalar_prefetch = 0 : i64, scratch_operands = 0 : i64, tpu.core_type = #tpu.core_type<tc>, window_params = [{transform_indices = @transform_0, window_bounds = array<i64: 1, 32, 256>}, {pipeline_mode = #tpu.pipeline_mode<synchronous>, transform_indices = @transform_1, window_bounds = array<i64: 32, 288>}, {pipeline_mode = #tpu.pipeline_mode<synchronous>, transform_indices = @transform_2, window_bounds = array<i64: 32, 1>}, {pipeline_mode = #tpu.pipeline_mode<synchronous>, transform_indices = @transform_3, window_bounds = array<i64: 32, 1>}, {pipeline_mode = #tpu.pipeline_mode<synchronous>, transform_indices = @transform_4, window_bounds = array<i64: 32, 288>}, {pipeline_mode = #tpu.pipeline_mode<synchronous>, transform_indices = @transform_5, window_bounds = array<i64: 32, 1>}, {pipeline_mode = #tpu.pipeline_mode<synchronous>, transform_indices = @transform_6, window_bounds = array<i64: 32, 1>}, {pipeline_mode = #tpu.pipeline_mode<synchronous>, transform_indices = @transform_7, window_bounds = array<i64: 9, 1, 256>}, {transform_indices = @transform_8, window_bounds = array<i64: 1, 32, 256>}]} {
    %c0 = arith.constant 0 : index
    %c0_0 = arith.constant 0 : index
    %c0_1 = arith.constant 0 : index
    %0 = vector.load %arg1[%c0, %c0_0, %c0_1] : memref<1x32x256xf32, #tpu.memory_space<vmem>>, vector<1x32x256xf32>
    %1 = vector.shape_cast %0 : vector<1x32x256xf32> to vector<32x256xf32>
    %c0_2 = arith.constant 0 : index
    %c0_3 = arith.constant 0 : index
    %c0_4 = arith.constant 0 : index
    %2 = vector.load %arg8[%c0_2, %c0_3, %c0_4] : memref<9x1x256xf32, #tpu.memory_space<vmem>>, vector<1x1x256xf32>
    %3 = vector.shape_cast %2 : vector<1x1x256xf32> to vector<1x256xf32>
    %c1 = arith.constant 1 : index
    %c0_5 = arith.constant 0 : index
    %c0_6 = arith.constant 0 : index
    %4 = vector.load %arg8[%c1, %c0_5, %c0_6] : memref<9x1x256xf32, #tpu.memory_space<vmem>>, vector<1x1x256xf32>
    %5 = vector.shape_cast %4 : vector<1x1x256xf32> to vector<1x256xf32>
    %c2 = arith.constant 2 : index
    %c0_7 = arith.constant 0 : index
    %c0_8 = arith.constant 0 : index
    %6 = vector.load %arg8[%c2, %c0_7, %c0_8] : memref<9x1x256xf32, #tpu.memory_space<vmem>>, vector<1x1x256xf32>
    %7 = vector.shape_cast %6 : vector<1x1x256xf32> to vector<1x256xf32>
    %c3 = arith.constant 3 : index
    %c0_9 = arith.constant 0 : index
    %c0_10 = arith.constant 0 : index
    %8 = vector.load %arg8[%c3, %c0_9, %c0_10] : memref<9x1x256xf32, #tpu.memory_space<vmem>>, vector<1x1x256xf32>
    %9 = vector.shape_cast %8 : vector<1x1x256xf32> to vector<1x256xf32>
    %c4 = arith.constant 4 : index
    %c0_11 = arith.constant 0 : index
    %c0_12 = arith.constant 0 : index
    %10 = vector.load %arg8[%c4, %c0_11, %c0_12] : memref<9x1x256xf32, #tpu.memory_space<vmem>>, vector<1x1x256xf32>
    %11 = vector.shape_cast %10 : vector<1x1x256xf32> to vector<1x256xf32>
    %c5 = arith.constant 5 : index
    %c0_13 = arith.constant 0 : index
    %c0_14 = arith.constant 0 : index
    %12 = vector.load %arg8[%c5, %c0_13, %c0_14] : memref<9x1x256xf32, #tpu.memory_space<vmem>>, vector<1x1x256xf32>
    %13 = vector.shape_cast %12 : vector<1x1x256xf32> to vector<1x256xf32>
    %c6 = arith.constant 6 : index
    %c0_15 = arith.constant 0 : index
    %c0_16 = arith.constant 0 : index
    %14 = vector.load %arg8[%c6, %c0_15, %c0_16] : memref<9x1x256xf32, #tpu.memory_space<vmem>>, vector<1x1x256xf32>
    %15 = vector.shape_cast %14 : vector<1x1x256xf32> to vector<1x256xf32>
    %c7 = arith.constant 7 : index
    %c0_17 = arith.constant 0 : index
    %c0_18 = arith.constant 0 : index
    %16 = vector.load %arg8[%c7, %c0_17, %c0_18] : memref<9x1x256xf32, #tpu.memory_space<vmem>>, vector<1x1x256xf32>
    %17 = vector.shape_cast %16 : vector<1x1x256xf32> to vector<1x256xf32>
    %c8 = arith.constant 8 : index
    %c0_19 = arith.constant 0 : index
    %c0_20 = arith.constant 0 : index
    %18 = vector.load %arg8[%c8, %c0_19, %c0_20] : memref<9x1x256xf32, #tpu.memory_space<vmem>>, vector<1x1x256xf32>
    %19 = vector.shape_cast %18 : vector<1x1x256xf32> to vector<1x256xf32>
    %c17_i32 = arith.constant 17 : i32
    %20 = tpu.dynamic_rotate %1 by %c17_i32 dim 1 : vector<32x256xf32>, i32 -> vector<32x256xf32>
    %21 = vector.broadcast %3 : vector<1x256xf32> to vector<32x256xf32>
    %22 = arith.mulf %20, %21 : vector<32x256xf32>
    %c16_i32 = arith.constant 16 : i32
    %23 = tpu.dynamic_rotate %1 by %c16_i32 dim 1 : vector<32x256xf32>, i32 -> vector<32x256xf32>
    %24 = vector.broadcast %5 : vector<1x256xf32> to vector<32x256xf32>
    %25 = arith.mulf %23, %24 : vector<32x256xf32>
    %c15_i32 = arith.constant 15 : i32
    %26 = tpu.dynamic_rotate %1 by %c15_i32 dim 1 : vector<32x256xf32>, i32 -> vector<32x256xf32>
    %27 = vector.broadcast %7 : vector<1x256xf32> to vector<32x256xf32>
    %28 = arith.mulf %26, %27 : vector<32x256xf32>
    %c1_i32 = arith.constant 1 : i32
    %29 = tpu.dynamic_rotate %1 by %c1_i32 dim 1 : vector<32x256xf32>, i32 -> vector<32x256xf32>
    %30 = vector.broadcast %9 : vector<1x256xf32> to vector<32x256xf32>
    %31 = arith.mulf %29, %30 : vector<32x256xf32>
    %32 = vector.broadcast %11 : vector<1x256xf32> to vector<32x256xf32>
    %33 = arith.mulf %1, %32 : vector<32x256xf32>
    %c255_i32 = arith.constant 255 : i32
    %34 = tpu.dynamic_rotate %1 by %c255_i32 dim 1 : vector<32x256xf32>, i32 -> vector<32x256xf32>
    %35 = vector.broadcast %13 : vector<1x256xf32> to vector<32x256xf32>
    %36 = arith.mulf %34, %35 : vector<32x256xf32>
    %c241_i32 = arith.constant 241 : i32
    %37 = tpu.dynamic_rotate %1 by %c241_i32 dim 1 : vector<32x256xf32>, i32 -> vector<32x256xf32>
    %38 = vector.broadcast %15 : vector<1x256xf32> to vector<32x256xf32>
    %39 = arith.mulf %37, %38 : vector<32x256xf32>
    %c240_i32 = arith.constant 240 : i32
    %40 = tpu.dynamic_rotate %1 by %c240_i32 dim 1 : vector<32x256xf32>, i32 -> vector<32x256xf32>
    %41 = vector.broadcast %17 : vector<1x256xf32> to vector<32x256xf32>
    %42 = arith.mulf %40, %41 : vector<32x256xf32>
    %c239_i32 = arith.constant 239 : i32
    %43 = tpu.dynamic_rotate %1 by %c239_i32 dim 1 : vector<32x256xf32>, i32 -> vector<32x256xf32>
    %44 = vector.broadcast %19 : vector<1x256xf32> to vector<32x256xf32>
    %45 = arith.mulf %43, %44 : vector<32x256xf32>
    %46 = tpu.concatenate %22, %25, %28, %31, %33, %36, %39, %42, %45 in 0 : vector<32x256xf32>, vector<32x256xf32>, vector<32x256xf32>, vector<32x256xf32>, vector<32x256xf32>, vector<32x256xf32>, vector<32x256xf32>, vector<32x256xf32>, vector<32x256xf32> -> vector<288x256xf32>
    %c0_21 = arith.constant 0 : index
    %c0_22 = arith.constant 0 : index
    %47 = vector.load %arg2[%c0_21, %c0_22] : memref<32x288xf32, #tpu.memory_space<vmem>>, vector<32x288xf32>
    %cst = arith.constant dense<0.000000e+00> : vector<32x256xf32>
    %48 = tpu.matmul %47, %46, %cst {dimension_numbers = #tpu.dot_dimension_numbers<[1], [0], [0], [1], [0, 0, 1, 1], [], []>} : vector<32x288xf32>, vector<288x256xf32>, vector<32x256xf32> -> vector<32x256xf32>
    %cst_23 = arith.constant dense<0.000000e+00> : vector<32xf32>
    %49 = vector.multi_reduction <add>, %48, %cst_23 [1] : vector<32x256xf32> to vector<32xf32>
    %50 = vector.shape_cast %49 : vector<32xf32> to vector<32x1xf32>
    %cst_24 = arith.constant 2.560000e+02 : f32
    %51 = vector.broadcast %cst_24 : f32 to vector<32x1xf32>
    %52 = arith.divf %50, %51 : vector<32x1xf32>
    %53 = arith.mulf %48, %48 : vector<32x256xf32>
    %cst_25 = arith.constant dense<0.000000e+00> : vector<32xf32>
    %54 = vector.multi_reduction <add>, %53, %cst_25 [1] : vector<32x256xf32> to vector<32xf32>
    %55 = vector.shape_cast %54 : vector<32xf32> to vector<32x1xf32>
    %cst_26 = arith.constant 2.560000e+02 : f32
    %56 = vector.broadcast %cst_26 : f32 to vector<32x1xf32>
    %57 = arith.divf %55, %56 : vector<32x1xf32>
    %58 = arith.mulf %52, %52 : vector<32x1xf32>
    %59 = arith.subf %57, %58 : vector<32x1xf32>
    %c0_27 = arith.constant 0 : index
    %c0_28 = arith.constant 0 : index
    %60 = vector.load %arg3[%c0_27, %c0_28] : memref<32x1xf32, #tpu.memory_space<vmem>>, vector<32x1xf32>
    %cst_29 = arith.constant 9.99999974E-6 : f32
    %61 = vector.broadcast %cst_29 : f32 to vector<32x1xf32>
    %62 = arith.addf %59, %61 : vector<32x1xf32>
    %63 = math.rsqrt %62 : vector<32x1xf32>
    %64 = arith.mulf %60, %63 : vector<32x1xf32>
    %c0_30 = arith.constant 0 : index
    %c0_31 = arith.constant 0 : index
    %65 = vector.load %arg4[%c0_30, %c0_31] : memref<32x1xf32, #tpu.memory_space<vmem>>, vector<32x1xf32>
    %66 = arith.mulf %52, %64 : vector<32x1xf32>
    %67 = arith.subf %65, %66 : vector<32x1xf32>
    %68 = vector.broadcast %64 : vector<32x1xf32> to vector<32x256xf32>
    %69 = arith.mulf %48, %68 : vector<32x256xf32>
    %70 = vector.broadcast %67 : vector<32x1xf32> to vector<32x256xf32>
    %71 = arith.addf %69, %70 : vector<32x256xf32>
    %cst_32 = arith.constant 0.000000e+00 : f32
    %72 = vector.broadcast %cst_32 : f32 to vector<32x256xf32>
    %73 = arith.maximumf %71, %72 : vector<32x256xf32>
    %c17_i32_33 = arith.constant 17 : i32
    %74 = tpu.dynamic_rotate %73 by %c17_i32_33 dim 1 : vector<32x256xf32>, i32 -> vector<32x256xf32>
    %75 = vector.broadcast %3 : vector<1x256xf32> to vector<32x256xf32>
    %76 = arith.mulf %74, %75 : vector<32x256xf32>
    %c16_i32_34 = arith.constant 16 : i32
    %77 = tpu.dynamic_rotate %73 by %c16_i32_34 dim 1 : vector<32x256xf32>, i32 -> vector<32x256xf32>
    %78 = vector.broadcast %5 : vector<1x256xf32> to vector<32x256xf32>
    %79 = arith.mulf %77, %78 : vector<32x256xf32>
    %c15_i32_35 = arith.constant 15 : i32
    %80 = tpu.dynamic_rotate %73 by %c15_i32_35 dim 1 : vector<32x256xf32>, i32 -> vector<32x256xf32>
    %81 = vector.broadcast %7 : vector<1x256xf32> to vector<32x256xf32>
    %82 = arith.mulf %80, %81 : vector<32x256xf32>
    %c1_i32_36 = arith.constant 1 : i32
    %83 = tpu.dynamic_rotate %73 by %c1_i32_36 dim 1 : vector<32x256xf32>, i32 -> vector<32x256xf32>
    %84 = vector.broadcast %9 : vector<1x256xf32> to vector<32x256xf32>
    %85 = arith.mulf %83, %84 : vector<32x256xf32>
    %86 = vector.broadcast %11 : vector<1x256xf32> to vector<32x256xf32>
    %87 = arith.mulf %73, %86 : vector<32x256xf32>
    %c255_i32_37 = arith.constant 255 : i32
    %88 = tpu.dynamic_rotate %73 by %c255_i32_37 dim 1 : vector<32x256xf32>, i32 -> vector<32x256xf32>
    %89 = vector.broadcast %13 : vector<1x256xf32> to vector<32x256xf32>
    %90 = arith.mulf %88, %89 : vector<32x256xf32>
    %c241_i32_38 = arith.constant 241 : i32
    %91 = tpu.dynamic_rotate %73 by %c241_i32_38 dim 1 : vector<32x256xf32>, i32 -> vector<32x256xf32>
    %92 = vector.broadcast %15 : vector<1x256xf32> to vector<32x256xf32>
    %93 = arith.mulf %91, %92 : vector<32x256xf32>
    %c240_i32_39 = arith.constant 240 : i32
    %94 = tpu.dynamic_rotate %73 by %c240_i32_39 dim 1 : vector<32x256xf32>, i32 -> vector<32x256xf32>
    %95 = vector.broadcast %17 : vector<1x256xf32> to vector<32x256xf32>
    %96 = arith.mulf %94, %95 : vector<32x256xf32>
    %c239_i32_40 = arith.constant 239 : i32
    %97 = tpu.dynamic_rotate %73 by %c239_i32_40 dim 1 : vector<32x256xf32>, i32 -> vector<32x256xf32>
    %98 = vector.broadcast %19 : vector<1x256xf32> to vector<32x256xf32>
    %99 = arith.mulf %97, %98 : vector<32x256xf32>
    %100 = tpu.concatenate %76, %79, %82, %85, %87, %90, %93, %96, %99 in 0 : vector<32x256xf32>, vector<32x256xf32>, vector<32x256xf32>, vector<32x256xf32>, vector<32x256xf32>, vector<32x256xf32>, vector<32x256xf32>, vector<32x256xf32>, vector<32x256xf32> -> vector<288x256xf32>
    %c0_41 = arith.constant 0 : index
    %c0_42 = arith.constant 0 : index
    %101 = vector.load %arg5[%c0_41, %c0_42] : memref<32x288xf32, #tpu.memory_space<vmem>>, vector<32x288xf32>
    %cst_43 = arith.constant dense<0.000000e+00> : vector<32x256xf32>
    %102 = tpu.matmul %101, %100, %cst_43 {dimension_numbers = #tpu.dot_dimension_numbers<[1], [0], [0], [1], [0, 0, 1, 1], [], []>} : vector<32x288xf32>, vector<288x256xf32>, vector<32x256xf32> -> vector<32x256xf32>
    %cst_44 = arith.constant dense<0.000000e+00> : vector<32xf32>
    %103 = vector.multi_reduction <add>, %102, %cst_44 [1] : vector<32x256xf32> to vector<32xf32>
    %104 = vector.shape_cast %103 : vector<32xf32> to vector<32x1xf32>
    %cst_45 = arith.constant 2.560000e+02 : f32
    %105 = vector.broadcast %cst_45 : f32 to vector<32x1xf32>
    %106 = arith.divf %104, %105 : vector<32x1xf32>
    %107 = arith.mulf %102, %102 : vector<32x256xf32>
    %cst_46 = arith.constant dense<0.000000e+00> : vector<32xf32>
    %108 = vector.multi_reduction <add>, %107, %cst_46 [1] : vector<32x256xf32> to vector<32xf32>
    %109 = vector.shape_cast %108 : vector<32xf32> to vector<32x1xf32>
    %cst_47 = arith.constant 2.560000e+02 : f32
    %110 = vector.broadcast %cst_47 : f32 to vector<32x1xf32>
    %111 = arith.divf %109, %110 : vector<32x1xf32>
    %112 = arith.mulf %106, %106 : vector<32x1xf32>
    %113 = arith.subf %111, %112 : vector<32x1xf32>
    %c0_48 = arith.constant 0 : index
    %c0_49 = arith.constant 0 : index
    %114 = vector.load %arg6[%c0_48, %c0_49] : memref<32x1xf32, #tpu.memory_space<vmem>>, vector<32x1xf32>
    %cst_50 = arith.constant 9.99999974E-6 : f32
    %115 = vector.broadcast %cst_50 : f32 to vector<32x1xf32>
    %116 = arith.addf %113, %115 : vector<32x1xf32>
    %117 = math.rsqrt %116 : vector<32x1xf32>
    %118 = arith.mulf %114, %117 : vector<32x1xf32>
    %c0_51 = arith.constant 0 : index
    %c0_52 = arith.constant 0 : index
    %119 = vector.load %arg7[%c0_51, %c0_52] : memref<32x1xf32, #tpu.memory_space<vmem>>, vector<32x1xf32>
    %120 = arith.mulf %106, %118 : vector<32x1xf32>
    %121 = arith.subf %119, %120 : vector<32x1xf32>
    %122 = vector.broadcast %118 : vector<32x1xf32> to vector<32x256xf32>
    %123 = arith.mulf %102, %122 : vector<32x256xf32>
    %124 = vector.broadcast %121 : vector<32x1xf32> to vector<32x256xf32>
    %125 = arith.addf %123, %124 : vector<32x256xf32>
    %126 = arith.addf %1, %125 : vector<32x256xf32>
    %c0_53 = arith.constant 0 : index
    %c0_54 = arith.constant 0 : index
    %c0_55 = arith.constant 0 : index
    %127 = vector.load %arg9[%c0_53, %c0_54, %c0_55] : memref<1x32x256xf32, #tpu.memory_space<vmem>>, vector<1x32x256xf32>
    %128 = vector.shape_cast %127 : vector<1x32x256xf32> to vector<32x256xf32>
    %129 = vector.shape_cast %126 : vector<32x256xf32> to vector<1x32x256xf32>
    tpu.vector_store %arg9[%c0_53, %c0_54, %c0_55], %129 {strides = array<i32>} : memref<1x32x256xf32, #tpu.memory_space<vmem>>, vector<1x32x256xf32>,
    return
  }
  func.func @transform_0(%arg0: i32) -> (i32, i32, i32) {
    %c0_i32 = arith.constant 0 : i32
    %c0_i32_0 = arith.constant 0 : i32
    %c0_i32_1 = arith.constant 0 : i32
    return %arg0, %c0_i32, %c0_i32_0 : i32, i32, i32
  }
  func.func @transform_1(%arg0: i32) -> (i32, i32) {
    %c0_i32 = arith.constant 0 : i32
    %c0_i32_0 = arith.constant 0 : i32
    %c0_i32_1 = arith.constant 0 : i32
    return %c0_i32, %c0_i32_0 : i32, i32
  }
  func.func @transform_2(%arg0: i32) -> (i32, i32) {
    %c0_i32 = arith.constant 0 : i32
    %c0_i32_0 = arith.constant 0 : i32
    %c0_i32_1 = arith.constant 0 : i32
    return %c0_i32, %c0_i32_0 : i32, i32
  }
  func.func @transform_3(%arg0: i32) -> (i32, i32) {
    %c0_i32 = arith.constant 0 : i32
    %c0_i32_0 = arith.constant 0 : i32
    %c0_i32_1 = arith.constant 0 : i32
    return %c0_i32, %c0_i32_0 : i32, i32
  }
  func.func @transform_4(%arg0: i32) -> (i32, i32) {
    %c0_i32 = arith.constant 0 : i32
    %c0_i32_0 = arith.constant 0 : i32
    %c0_i32_1 = arith.constant 0 : i32
    return %c0_i32, %c0_i32_0 : i32, i32
  }
  func.func @transform_5(%arg0: i32) -> (i32, i32) {
    %c0_i32 = arith.constant 0 : i32
    %c0_i32_0 = arith.constant 0 : i32
    %c0_i32_1 = arith.constant 0 : i32
    return %c0_i32, %c0_i32_0 : i32, i32
  }
  func.func @transform_6(%arg0: i32) -> (i32, i32) {
    %c0_i32 = arith.constant 0 : i32
    %c0_i32_0 = arith.constant 0 : i32
    %c0_i32_1 = arith.constant 0 : i32
    return %c0_i32, %c0_i32_0 : i32, i32
  }
  func.func @transform_7(%arg0: i32) -> (i32, i32, i32) {
    %c0_i32 = arith.constant 0 : i32
    %c0_i32_0 = arith.constant 0 : i32
    %c0_i32_1 = arith.constant 0 : i32
    %c0_i32_2 = arith.constant 0 : i32
    return %c0_i32, %c0_i32_0, %c0_i32_1 : i32, i32, i32
  }
  func.func @transform_8(%arg0: i32) -> (i32, i32, i32) {
    %c0_i32 = arith.constant 0 : i32
    %c0_i32_0 = arith.constant 0 : i32
    %c0_i32_1 = arith.constant 0 : i32
    return %arg0, %c0_i32, %c0_i32_0 : i32, i32, i32
  }
}

</mosaic_0001>

<llo_original>
// kernel: residual_block_forward.1
$region0: #{residual_block_forward.1}
  #allocation0 [shape = 'u32[]', space=smem, size = 0x4, offset = 0x4, fixed_abs, tag = 'smem constant byte address 0x4 - core index']
  #allocation1 [shape = 'u32[72,128]{1,0:T(1,128)}', space=vmem, size = 0x9000, scoped, tag = 'internal scratch']
  %s0 = inlined_call_operand.vmem [shape: f32[2,32,256], index: 0, kind: input, shape index: {}]
  %s1 = inlined_call_operand.vmem [shape: f32[32,288], index: 1, kind: input, shape index: {}]
  %s2 = inlined_call_operand.vmem [shape: f32[32,1], index: 2, kind: input, shape index: {}]
  %s3 = inlined_call_operand.vmem [shape: f32[32,1], index: 3, kind: input, shape index: {}]
  %s4 = inlined_call_operand.vmem [shape: f32[32,288], index: 4, kind: input, shape index: {}]
  %s5 = inlined_call_operand.vmem [shape: f32[32,1], index: 5, kind: input, shape index: {}]
  %s6 = inlined_call_operand.vmem [shape: f32[32,1], index: 6, kind: input, shape index: {}]
  %s7 = inlined_call_operand.vmem [shape: f32[9,1,256], index: 7, kind: input, shape index: {}]
  %s8 = inlined_call_operand.vmem [shape: f32[2,32,256], index: 8, kind: output, shape index: {}]
  %s9 = sld [smem:[#allocation0]]
  $region65: #{residual_block_forward.1} parent=0
    _
  %s11 = ssub.s32 1, %s9
  %s12 = scalar_select 0, %s11, %s9
  loop: start=0, step=1, limit=4
  $region2: #{residual_block_forward.1} parent=0 // loop_pre_header
    _
  $region3: #{residual_block_forward.1} parent=0 // loop_header
    %s14 = sphi 0, %s18
    %p15 = scmp.ge.s32.totalorder %s14, 4
    %s24 = sphi 0, %s26
    %s27 = sphi 0, %s24
    %s28 = sphi 0, %s27
    %s44 = sphi 0, %s28
    %s48 = sphi 0, %s48
    %s50 = sphi 0, %s48
    %s51 = sphi 0, %s50
    %s65 = sphi 0, %s51
    %s69 = sphi 0, %s69
    %s71 = sphi 0, %s69
    %s72 = sphi 0, %s71
    %s86 = sphi 0, %s72
    %s90 = sphi 0, %s90
    %s92 = sphi 0, %s90
    %s93 = sphi 0, %s92
    %s107 = sphi 0, %s93
    %s111 = sphi 0, %s111
    %s113 = sphi 0, %s111
    %s114 = sphi 0, %s113
    %s128 = sphi 0, %s114
    %s132 = sphi 0, %s132
    %s134 = sphi 0, %s132
    %s135 = sphi 0, %s134
    %s149 = sphi 0, %s135
    %s153 = sphi 0, %s153
    %s155 = sphi 0, %s153
    %s156 = sphi 0, %s155
    %s170 = sphi 0, %s156
    %s174 = sphi 0, %s174
    %s176 = sphi 0, %s174
    %s177 = sphi 0, %s176
    %s191 = sphi 0, %s177
    %s197 = sphi 0, %s199
    %s200 = sphi 0, %s197
    %s201 = sphi 0, %s200
    %s217 = sphi 0, %s201
  $region4: #{residual_block_forward.1} parent=0 // loop_header_branch
    %17 = sbr.rel (%p15) target = $region8
  $region5: #{residual_block_forward.1} parent=0 // loop_body
    %s19 = ssub.s32 %s14, 1
    %s20 = ssub.s32 %s14, 2
    %s21 = sadd.s32 %s14, 1
    %s22 = ssub.s32 %s14, %s21
    %p23 = scmp.eq.s32.totalorder %s22, 0
    %s25 = sadd.s32 %s24, 1
    %s26 = scalar_select %p23, %s24, %s25
    %p29 = pneg %p23
    %p30 = scmp.eq.s32.totalorder %s14, 1
    %p31 = por %p29, %p30
    %p32 = scmp.ne.s32.totalorder %s24, %s27
    %p33 = scmp.eq.s32.totalorder %s14, 0
    %p34 = por %p32, %p33
    %p35 = scmp.ne.s32.totalorder %s24, %s27
    %p36 = scmp.eq.s32.totalorder %s19, 1
    %p37 = por %p35, %p36
    %p38 = scmp.ne.s32.totalorder %s27, %s28
    %p39 = scmp.eq.s32.totalorder %s19, 0
    %p40 = por %p38, %p39
    %p41 = scmp.ne.s32.totalorder %s27, %s28
    %p42 = scmp.eq.s32.totalorder %s20, 1
    %p43 = por %p41, %p42
    %p45 = scmp.ne.s32.totalorder %s28, %s44
    %p46 = scmp.eq.s32.totalorder %s20, 0
    %p47 = por %p45, %p46
    %s49 = sadd.s32 %s48, 1
    %p52 = scmp.eq.s32.totalorder %s14, 1
    %p53 = scmp.ne.s32.totalorder %s48, %s50
    %p54 = scmp.eq.s32.totalorder %s14, 0
    %p55 = por %p53, %p54
    %p56 = scmp.ne.s32.totalorder %s48, %s50
    %p57 = scmp.eq.s32.totalorder %s19, 1
    %p58 = por %p56, %p57
    %p59 = scmp.ne.s32.totalorder %s50, %s51
    %p60 = scmp.eq.s32.totalorder %s19, 0
    %p61 = por %p59, %p60
    %p62 = scmp.ne.s32.totalorder %s50, %s51
    %p63 = scmp.eq.s32.totalorder %s20, 1
    %p64 = por %p62, %p63
    %p66 = scmp.ne.s32.totalorder %s51, %s65
    %p67 = scmp.eq.s32.totalorder %s20, 0
    %p68 = por %p66, %p67
    %s70 = sadd.s32 %s69, 1
    %p73 = scmp.eq.s32.totalorder %s14, 1
    %p74 = scmp.ne.s32.totalorder %s69, %s71
    %p75 = scmp.eq.s32.totalorder %s14, 0
    %p76 = por %p74, %p75
    %p77 = scmp.ne.s32.totalorder %s69, %s71
    %p78 = scmp.eq.s32.totalorder %s19, 1
    %p79 = por %p77, %p78
    %p80 = scmp.ne.s32.totalorder %s71, %s72
    %p81 = scmp.eq.s32.totalorder %s19, 0
    %p82 = por %p80, %p81
    %p83 = scmp.ne.s32.totalorder %s71, %s72
    %p84 = scmp.eq.s32.totalorder %s20, 1
    %p85 = por %p83, %p84
    %p87 = scmp.ne.s32.totalorder %s72, %s86
    %p88 = scmp.eq.s32.totalorder %s20, 0
    %p89 = por %p87, %p88
    %s91 = sadd.s32 %s90, 1
    %p94 = scmp.eq.s32.totalorder %s14, 1
    %p95 = scmp.ne.s32.totalorder %s90, %s92
    %p96 = scmp.eq.s32.totalorder %s14, 0
    %p97 = por %p95, %p96
    %p98 = scmp.ne.s32.totalorder %s90, %s92
    %p99 = scmp.eq.s32.totalorder %s19, 1
    %p100 = por %p98, %p99
    %p101 = scmp.ne.s32.totalorder %s92, %s93
    %p102 = scmp.eq.s32.totalorder %s19, 0
    %p103 = por %p101, %p102
    %p104 = scmp.ne.s32.totalorder %s92, %s93
    %p105 = scmp.eq.s32.totalorder %s20, 1
    %p106 = por %p104, %p105
    %p108 = scmp.ne.s32.totalorder %s93, %s107
    %p109 = scmp.eq.s32.totalorder %s20, 0
    %p110 = por %p108, %p109
    %s112 = sadd.s32 %s111, 1
    %p115 = scmp.eq.s32.totalorder %s14, 1
    %p116 = scmp.ne.s32.totalorder %s111, %s113
    %p117 = scmp.eq.s32.totalorder %s14, 0
    %p118 = por %p116, %p117
    %p119 = scmp.ne.s32.totalorder %s111, %s113
    %p120 = scmp.eq.s32.totalorder %s19, 1
    %p121 = por %p119, %p120
    %p122 = scmp.ne.s32.totalorder %s113, %s114
    %p123 = scmp.eq.s32.totalorder %s19, 0
    %p124 = por %p122, %p123
    %p125 = scmp.ne.s32.totalorder %s113, %s114
    %p126 = scmp.eq.s32.totalorder %s20, 1
    %p127 = por %p125, %p126
    %p129 = scmp.ne.s32.totalorder %s114, %s128
    %p130 = scmp.eq.s32.totalorder %s20, 0
    %p131 = por %p129, %p130
    %s133 = sadd.s32 %s132, 1
    %p136 = scmp.eq.s32.totalorder %s14, 1
    %p137 = scmp.ne.s32.totalorder %s132, %s134
    %p138 = scmp.eq.s32.totalorder %s14, 0
    %p139 = por %p137, %p138
    %p140 = scmp.ne.s32.totalorder %s132, %s134
    %p141 = scmp.eq.s32.totalorder %s19, 1
    %p142 = por %p140, %p141
    %p143 = scmp.ne.s32.totalorder %s134, %s135
    %p144 = scmp.eq.s32.totalorder %s19, 0
    %p145 = por %p143, %p144
    %p146 = scmp.ne.s32.totalorder %s134, %s135
    %p147 = scmp.eq.s32.totalorder %s20, 1
    %p148 = por %p146, %p147
    %p150 = scmp.ne.s32.totalorder %s135, %s149
    %p151 = scmp.eq.s32.totalorder %s20, 0
    %p152 = por %p150, %p151
    %s154 = sadd.s32 %s153, 1
    %p157 = scmp.eq.s32.totalorder %s14, 1
    %p158 = scmp.ne.s32.totalorder %s153, %s155
    %p159 = scmp.eq.s32.totalorder %s14, 0
    %p160 = por %p158, %p159
    %p161 = scmp.ne.s32.totalorder %s153, %s155
    %p162 = scmp.eq.s32.totalorder %s19, 1
    %p163 = por %p161, %p162
    %p164 = scmp.ne.s32.totalorder %s155, %s156
    %p165 = scmp.eq.s32.totalorder %s19, 0
    %p166 = por %p164, %p165
    %p167 = scmp.ne.s32.totalorder %s155, %s156
    %p168 = scmp.eq.s32.totalorder %s20, 1
    %p169 = por %p167, %p168
    %p171 = scmp.ne.s32.totalorder %s156, %s170
    %p172 = scmp.eq.s32.totalorder %s20, 0
    %p173 = por %p171, %p172
    %s175 = sadd.s32 %s174, 1
    %p178 = scmp.eq.s32.totalorder %s14, 1
    %p179 = scmp.ne.s32.totalorder %s174, %s176
    %p180 = scmp.eq.s32.totalorder %s14, 0
    %p181 = por %p179, %p180
    %p182 = scmp.ne.s32.totalorder %s174, %s176
    %p183 = scmp.eq.s32.totalorder %s19, 1
    %p184 = por %p182, %p183
    %p185 = scmp.ne.s32.totalorder %s176, %s177
    %p186 = scmp.eq.s32.totalorder %s19, 0
    %p187 = por %p185, %p186
    %p188 = scmp.ne.s32.totalorder %s176, %s177
    %p189 = scmp.eq.s32.totalorder %s20, 1
    %p190 = por %p188, %p189
    %p192 = scmp.ne.s32.totalorder %s177, %s191
    %p193 = scmp.eq.s32.totalorder %s20, 0
    %p194 = por %p192, %p193
    %s195 = ssub.s32 %s14, %s21
    %p196 = scmp.eq.s32.totalorder %s195, 0
    %s198 = sadd.s32 %s197, 1
    %s199 = scalar_select %p196, %s197, %s198
    %p202 = pneg %p196
    %p203 = scmp.eq.s32.totalorder %s14, 1
    %p204 = por %p202, %p203
    %p205 = scmp.ne.s32.totalorder %s197, %s200
    %p206 = scmp.eq.s32.totalorder %s14, 0
    %p207 = por %p205, %p206
    %p208 = scmp.ne.s32.totalorder %s197, %s200
    %p209 = scmp.eq.s32.totalorder %s19, 1
    %p210 = por %p208, %p209
    %p211 = scmp.ne.s32.totalorder %s200, %s201
    %p212 = scmp.eq.s32.totalorder %s19, 0
    %p213 = por %p211, %p212
    %p214 = scmp.ne.s32.totalorder %s200, %s201
    %p215 = scmp.eq.s32.totalorder %s20, 1
    %p216 = por %p214, %p215
    %p218 = scmp.ne.s32.totalorder %s201, %s217
    %p219 = scmp.eq.s32.totalorder %s20, 0
    %p220 = por %p218, %p219
    %p221 = scmp.le.s32.totalorder 1, %s14
    %p222 = scmp.lt.s32.totalorder %s14, 3
    %p223 = pnand %p221, %p222
    %p224 = pneg %p223
    // Predicated region
    $region9: #{residual_block_forward.1} parent=5 // pred_check
      _
    $region10: #{residual_block_forward.1} parent=5 // pred_check_branch
      %226 = sbr.rel (%p223) target = $region12
    $region11: #{residual_block_forward.1} parent=5 // pred_region
      %s227 = ssub.s32 %s14, 1
      // Predicated region
      $region13: #{residual_block_forward.1} parent=11 // pred_check
        %p228 = pneg %p61
      $region14: #{residual_block_forward.1} parent=11 // pred_check_branch
        %230 = sbr.rel (%p228) target = $region16
      $region15: #{residual_block_forward.1} parent=11 // pred_region
        _
      $region16: #{residual_block_forward.1} parent=11 // pred_fallthru
        _
      // Predicated region
      $region17: #{residual_block_forward.1} parent=11 // pred_check
        %p231 = pneg %p82
      $region18: #{residual_block_forward.1} parent=11 // pred_check_branch
        %233 = sbr.rel (%p231) target = $region20
      $region19: #{residual_block_forward.1} parent=11 // pred_region
        _
      $region20: #{residual_block_forward.1} parent=11 // pred_fallthru
        _
      // Predicated region
      $region21: #{residual_block_forward.1} parent=11 // pred_check
        %p234 = pneg %p103
      $region22: #{residual_block_forward.1} parent=11 // pred_check_branch
        %236 = sbr.rel (%p234) target = $region24
      $region23: #{residual_block_forward.1} parent=11 // pred_region
        _
      $region24: #{residual_block_forward.1} parent=11 // pred_fallthru
        _
      // Predicated region
      $region25: #{residual_block_forward.1} parent=11 // pred_check
        %p237 = pneg %p124
      $region26: #{residual_block_forward.1} parent=11 // pred_check_branch
        %239 = sbr.rel (%p237) target = $region28
      $region27: #{residual_block_forward.1} parent=11 // pred_region
        _
      $region28: #{residual_block_forward.1} parent=11 // pred_fallthru
        _
      // Predicated region
      $region29: #{residual_block_forward.1} parent=11 // pred_check
        %p240 = pneg %p145
      $region30: #{residual_block_forward.1} parent=11 // pred_check_branch
        %242 = sbr.rel (%p240) target = $region32
      $region31: #{residual_block_forward.1} parent=11 // pred_region
        _
      $region32: #{residual_block_forward.1} parent=11 // pred_fallthru
        _
      // Predicated region
      $region33: #{residual_block_forward.1} parent=11 // pred_check
        %p243 = pneg %p166
      $region34: #{residual_block_forward.1} parent=11 // pred_check_branch
        %245 = sbr.rel (%p243) target = $region36
      $region35: #{residual_block_forward.1} parent=11 // pred_region
        _
      $region36: #{residual_block_forward.1} parent=11 // pred_fallthru
        _
      // Predicated region
      $region37: #{residual_block_forward.1} parent=11 // pred_check
        %p246 = pneg %p187
      $region38: #{residual_block_forward.1} parent=11 // pred_check_branch
        %248 = sbr.rel (%p246) target = $region40
      $region39: #{residual_block_forward.1} parent=11 // pred_region
        _
      $region40: #{residual_block_forward.1} parent=11 // pred_fallthru
        _
    $region12: #{residual_block_forward.1} parent=5 // pred_fallthru
      _
    %p249 = scmp.lt.s32.totalorder %s14, 2
    // Predicated region
    $region41: #{residual_block_forward.1} parent=5 // pred_check
      %p250 = pneg %p249
    $region42: #{residual_block_forward.1} parent=5 // pred_check_branch
      %252 = sbr.rel (%p250) target = $region44
    $region43: #{residual_block_forward.1} parent=5 // pred_region
      // Predicated region
      $region45: #{residual_block_forward.1} parent=43 // pred_check
        %p253 = pneg %p34
      $region46: #{residual_block_forward.1} parent=43 // pred_check_branch
        %255 = sbr.rel (%p253) target = $region48
      $region47: #{residual_block_forward.1} parent=43 // pred_region
        %p256 = scmp.lt.s32.totalorder %s14, 1
        %s257 = scalar_select %p256, %s14, 1
        %s258 = smul.addr %s257, 8
        %s259 = smul.addr %s258, 8
        %s260 = scalar_lea.vmem %s0, %s259
      $region48: #{residual_block_forward.1} parent=43 // pred_fallthru
        _
    $region44: #{residual_block_forward.1} parent=5 // pred_fallthru
      _
    %p261 = scmp.le.s32.totalorder 1, %s14
    %p262 = scmp.lt.s32.totalorder %s14, 3
    %p263 = pnand %p261, %p262
    %p264 = pneg %p263
    // Predicated region
    $region49: #{residual_block_forward.1} parent=5 // pred_check
      _
    $region50: #{residual_block_forward.1} parent=5 // pred_check_branch
      %266 = sbr.rel (%p263) target = $region52
    $region51: #{residual_block_forward.1} parent=5 // pred_region
      %s267 = ssub.s32 %s14, 1
      %p268 = scmp.lt.s32.totalorder %s19, 1
      %s269 = scalar_select %p268, %s19, 1
      %s270 = smul.addr %s269, 8
      %s271 = smul.addr %s270, 8
      %s272 = scalar_lea.vmem %s0, %s271
      %p273 = pneg %p40
      %p274 = pneg %p37
      %p275 = pneg %p61
      %p276 = pneg %p58
      %p277 = pneg %p82
      %p278 = pneg %p79
      %p279 = pneg %p103
      %p280 = pneg %p100
      %p281 = pneg %p124
      %p282 = pneg %p121
      %p283 = pneg %p145
      %p284 = pneg %p142
      %p285 = pneg %p166
      %p286 = pneg %p163
      %p287 = pneg %p187
      %p288 = pneg %p184
      %p289 = pneg %p213
      %p290 = pneg %p210
      %p291 = scmp.lt.s32.totalorder %s19, 1
      %s292 = scalar_select %p291, %s19, 1
      %s293 = smul.addr %s292, 8
      %s294 = smul.addr %s293, 8
      %s295 = scalar_lea.vmem %s8, %s294
      %p296 = scmp.lt.s32.totalorder %s19, 1
      %s297 = scalar_select %p296, %s19, 1
      %s298 = smul.addr %s297, 8
      %s299 = smul.addr %s298, 8
      %s300 = scalar_lea.vmem %s0, %s299
      %p301 = scmp.lt.s32.totalorder %s19, 1
      %s302 = scalar_select %p301, %s19, 1
      %s303 = smul.addr %s302, 8
      %s304 = smul.addr %s303, 8
      %s305 = scalar_lea.vmem %s8, %s304
      %v306 = vld [vmem:[%s300] sm:$0xff]
      %v307 = vld [vmem:[%s300 + $0x8] sm:$0xff]
      %v308 = vld [vmem:[%s300 + $0x10] sm:$0xff]
      %v309 = vld [vmem:[%s300 + $0x18] sm:$0xff]
      %v310 = vld [vmem:[%s300 + $0x20] sm:$0xff]
      %v311 = vld [vmem:[%s300 + $0x28] sm:$0xff]
      %v312 = vld [vmem:[%s300 + $0x30] sm:$0xff]
      %v313 = vld [vmem:[%s300 + $0x38] sm:$0xff]
      %v314 = vld [vmem:[%s7] sm:$0x3]
      %s315 = scalar_lea.vmem %s7, 2
      %v316 = vld [vmem:[%s315] sm:$0x3]
      %s317 = scalar_lea.vmem %s7, 4
      %v318 = vld [vmem:[%s317] sm:$0x3]
      %s319 = scalar_lea.vmem %s7, 6
      %v320 = vld [vmem:[%s319] sm:$0x3]
      %s321 = scalar_lea.vmem %s7, 8
      %v322 = vld [vmem:[%s321] sm:$0x3]
      %s323 = scalar_lea.vmem %s7, 10
      %v324 = vld [vmem:[%s323] sm:$0x3]
      %s325 = scalar_lea.vmem %s7, 12
      %v326 = vld [vmem:[%s325] sm:$0x3]
      %s327 = scalar_lea.vmem %s7, 14
      %v328 = vld [vmem:[%s327] sm:$0x3]
      %s329 = scalar_lea.vmem %s7, 16
      %v330 = vld [vmem:[%s329] sm:$0x3]
      %331 = vrot.lane.b32.xlu0 %v306, 17
      %v332 = vpop.permute.xlu0 %331
      %333 = vrot.lane.b32.xlu0 %v308, 17
      %v334 = vpop.permute.xlu0 %333
      %335 = vrot.lane.b32.xlu0 %v310, 17
      %v336 = vpop.permute.xlu0 %335
      %337 = vrot.lane.b32.xlu0 %v312, 17
      %v338 = vpop.permute.xlu0 %337
      %339 = vrot.lane.b32.xlu0 %v307, 17
      %v340 = vpop.permute.xlu0 %339
      %341 = vrot.lane.b32.xlu0 %v309, 17
      %v342 = vpop.permute.xlu0 %341
      %343 = vrot.lane.b32.xlu0 %v311, 17
      %v344 = vpop.permute.xlu0 %343
      %345 = vrot.lane.b32.xlu0 %v313, 17
      %v346 = vpop.permute.xlu0 %345
      %v347 = vlaneseq
      %v348 = vand.u32 %v347, 127
      %vm349 = vcmp.lt.s32.totalorder %v348, 17
      %v350 = vsel %vm349, %v332, %v340
      %v351 = vsel %vm349, %v334, %v342
      %v352 = vsel %vm349, %v336, %v344
      %v353 = vsel %vm349, %v338, %v346
      %v354 = vsel %vm349, %v340, %v332
      %v355 = vsel %vm349, %v342, %v334
      %v356 = vsel %vm349, %v344, %v336
      %v357 = vsel %vm349, %v346, %v338
      %v359 = vperm.slane %v314, 0
      %v360 = vperm.slane %v314, 1
      %v363 = vmul.f32 %v354, %v359
      %v364 = vmul.f32 %v350, %v360
      %v365 = vmul.f32 %v355, %v359
      %v366 = vmul.f32 %v351, %v360
      %v367 = vmul.f32 %v356, %v359
      %v368 = vmul.f32 %v352, %v360
      %v369 = vmul.f32 %v357, %v359
      %v370 = vmul.f32 %v353, %v360
      %371 = vrot.lane.b32.xlu0 %v306, 16
      %v372 = vpop.permute.xlu0 %371
      %373 = vrot.lane.b32.xlu0 %v308, 16
      %v374 = vpop.permute.xlu0 %373
      %375 = vrot.lane.b32.xlu0 %v310, 16
      %v376 = vpop.permute.xlu0 %375
      %377 = vrot.lane.b32.xlu0 %v312, 16
      %v378 = vpop.permute.xlu0 %377
      %379 = vrot.lane.b32.xlu0 %v307, 16
      %v380 = vpop.permute.xlu0 %379
      %381 = vrot.lane.b32.xlu0 %v309, 16
      %v382 = vpop.permute.xlu0 %381
      %383 = vrot.lane.b32.xlu0 %v311, 16
      %v384 = vpop.permute.xlu0 %383
      %385 = vrot.lane.b32.xlu0 %v313, 16
      %v386 = vpop.permute.xlu0 %385
      %vm387 = vcmp.lt.s32.totalorder %v348, 16
      %v388 = vsel %vm387, %v372, %v380
      %v389 = vsel %vm387, %v374, %v382
      %v390 = vsel %vm387, %v376, %v384
      %v391 = vsel %vm387, %v378, %v386
      %v392 = vsel %vm387, %v380, %v372
      %v393 = vsel %vm387, %v382, %v374
      %v394 = vsel %vm387, %v384, %v376
      %v395 = vsel %vm387, %v386, %v378
      %v397 = vperm.slane %v316, 0
      %v398 = vperm.slane %v316, 1
      %v401 = vmul.f32 %v392, %v397
      %v402 = vmul.f32 %v388, %v398
      %v403 = vmul.f32 %v393, %v397
      %v404 = vmul.f32 %v389, %v398
      %v405 = vmul.f32 %v394, %v397
      %v406 = vmul.f32 %v390, %v398
      %v407 = vmul.f32 %v395, %v397
      %v408 = vmul.f32 %v391, %v398
      %409 = vrot.lane.b32.xlu0 %v306, 15
      %v410 = vpop.permute.xlu0 %409
      %411 = vrot.lane.b32.xlu0 %v308, 15
      %v412 = vpop.permute.xlu0 %411
      %413 = vrot.lane.b32.xlu0 %v310, 15
      %v414 = vpop.permute.xlu0 %413
      %415 = vrot.lane.b32.xlu0 %v312, 15
      %v416 = vpop.permute.xlu0 %415
      %417 = vrot.lane.b32.xlu0 %v307, 15
      %v418 = vpop.permute.xlu0 %417
      %419 = vrot.lane.b32.xlu0 %v309, 15
      %v420 = vpop.permute.xlu0 %419
      %421 = vrot.lane.b32.xlu0 %v311, 15
      %v422 = vpop.permute.xlu0 %421
      %423 = vrot.lane.b32.xlu0 %v313, 15
      %v424 = vpop.permute.xlu0 %423
      %vm425 = vcmp.lt.s32.totalorder %v348, 15
      %v426 = vsel %vm425, %v410, %v418
      %v427 = vsel %vm425, %v412, %v420
      %v428 = vsel %vm425, %v414, %v422
      %v429 = vsel %vm425, %v416, %v424
      %v430 = vsel %vm425, %v418, %v410
      %v431 = vsel %vm425, %v420, %v412
      %v432 = vsel %vm425, %v422, %v414
      %v433 = vsel %vm425, %v424, %v416
      %v435 = vperm.slane %v318, 0
      %v436 = vperm.slane %v318, 1
      %v439 = vmul.f32 %v430, %v435
      %v440 = vmul.f32 %v426, %v436
      %v441 = vmul.f32 %v431, %v435
      %v442 = vmul.f32 %v427, %v436
      %v443 = vmul.f32 %v432, %v435
      %v444 = vmul.f32 %v428, %v436
      %v445 = vmul.f32 %v433, %v435
      %v446 = vmul.f32 %v429, %v436
      %447 = vrot.lane.b32.xlu0 %v306, 1
      %v448 = vpop.permute.xlu0 %447
      %449 = vrot.lane.b32.xlu0 %v308, 1
      %v450 = vpop.permute.xlu0 %449
      %451 = vrot.lane.b32.xlu0 %v310, 1
      %v452 = vpop.permute.xlu0 %451
      %453 = vrot.lane.b32.xlu0 %v312, 1
      %v454 = vpop.permute.xlu0 %453
      %455 = vrot.lane.b32.xlu0 %v307, 1
      %v456 = vpop.permute.xlu0 %455
      %457 = vrot.lane.b32.xlu0 %v309, 1
      %v458 = vpop.permute.xlu0 %457
      %459 = vrot.lane.b32.xlu0 %v311, 1
      %v460 = vpop.permute.xlu0 %459
      %461 = vrot.lane.b32.xlu0 %v313, 1
      %v462 = vpop.permute.xlu0 %461
      %vm463 = vcmp.lt.s32.totalorder %v348, 1
      %v464 = vsel %vm463, %v448, %v456
      %v465 = vsel %vm463, %v450, %v458
      %v466 = vsel %vm463, %v452, %v460
      %v467 = vsel %vm463, %v454, %v462
      %v468 = vsel %vm463, %v456, %v448
      %v469 = vsel %vm463, %v458, %v450
      %v470 = vsel %vm463, %v460, %v452
      %v471 = vsel %vm463, %v462, %v454
      %v473 = vperm.slane %v320, 0
      %v474 = vperm.slane %v320, 1
      %v477 = vmul.f32 %v468, %v473
      %v478 = vmul.f32 %v464, %v474
      %v479 = vmul.f32 %v469, %v473
      %v480 = vmul.f32 %v465, %v474
      %v481 = vmul.f32 %v470, %v473
      %v482 = vmul.f32 %v466, %v474
      %v483 = vmul.f32 %v471, %v473
      %v484 = vmul.f32 %v467, %v474
      %v486 = vperm.slane %v322, 0
      %v487 = vperm.slane %v322, 1
      %v490 = vmul.f32 %v306, %v486
      %v491 = vmul.f32 %v307, %v487
      %v492 = vmul.f32 %v308, %v486
      %v493 = vmul.f32 %v309, %v487
      %v494 = vmul.f32 %v310, %v486
      %v495 = vmul.f32 %v311, %v487
      %v496 = vmul.f32 %v312, %v486
      %v497 = vmul.f32 %v313, %v487
      %498 = vrot.lane.b32.xlu0 %v306, 127
      %v499 = vpop.permute.xlu0 %498
      %500 = vrot.lane.b32.xlu0 %v308, 127
      %v501 = vpop.permute.xlu0 %500
      %502 = vrot.lane.b32.xlu0 %v310, 127
      %v503 = vpop.permute.xlu0 %502
      %504 = vrot.lane.b32.xlu0 %v312, 127
      %v505 = vpop.permute.xlu0 %504
      %506 = vrot.lane.b32.xlu0 %v307, 127
      %v507 = vpop.permute.xlu0 %506
      %508 = vrot.lane.b32.xlu0 %v309, 127
      %v509 = vpop.permute.xlu0 %508
      %510 = vrot.lane.b32.xlu0 %v311, 127
      %v511 = vpop.permute.xlu0 %510
      %512 = vrot.lane.b32.xlu0 %v313, 127
      %v513 = vpop.permute.xlu0 %512
      %vm514 = vcmp.lt.s32.totalorder %v348, 127
      %v515 = vsel %vm514, %v499, %v507
      %v516 = vsel %vm514, %v501, %v509
      %v517 = vsel %vm514, %v503, %v511
      %v518 = vsel %vm514, %v505, %v513
      %v519 = vsel %vm514, %v507, %v499
      %v520 = vsel %vm514, %v509, %v501
      %v521 = vsel %vm514, %v511, %v503
      %v522 = vsel %vm514, %v513, %v505
      %v524 = vperm.slane %v324, 0
      %v525 = vperm.slane %v324, 1
      %v528 = vmul.f32 %v515, %v524
      %v529 = vmul.f32 %v519, %v525
      %v530 = vmul.f32 %v516, %v524
      %v531 = vmul.f32 %v520, %v525
      %v532 = vmul.f32 %v517, %v524
      %v533 = vmul.f32 %v521, %v525
      %v534 = vmul.f32 %v518, %v524
      %v535 = vmul.f32 %v522, %v525
      %536 = vrot.lane.b32.xlu0 %v306, 113
      %v537 = vpop.permute.xlu0 %536
      %538 = vrot.lane.b32.xlu0 %v308, 113
      %v539 = vpop.permute.xlu0 %538
      %540 = vrot.lane.b32.xlu0 %v310, 113
      %v541 = vpop.permute.xlu0 %540
      %542 = vrot.lane.b32.xlu0 %v312, 113
      %v543 = vpop.permute.xlu0 %542
      %544 = vrot.lane.b32.xlu0 %v307, 113
      %v545 = vpop.permute.xlu0 %544
      %546 = vrot.lane.b32.xlu0 %v309, 113
      %v547 = vpop.permute.xlu0 %546
      %548 = vrot.lane.b32.xlu0 %v311, 113
      %v549 = vpop.permute.xlu0 %548
      %550 = vrot.lane.b32.xlu0 %v313, 113
      %v551 = vpop.permute.xlu0 %550
      %vm552 = vcmp.lt.s32.totalorder %v348, 113
      %v553 = vsel %vm552, %v537, %v545
      %v554 = vsel %vm552, %v539, %v547
      %v555 = vsel %vm552, %v541, %v549
      %v556 = vsel %vm552, %v543, %v551
      %v557 = vsel %vm552, %v545, %v537
      %v558 = vsel %vm552, %v547, %v539
      %v559 = vsel %vm552, %v549, %v541
      %v560 = vsel %vm552, %v551, %v543
      %v562 = vperm.slane %v326, 0
      %v563 = vperm.slane %v326, 1
      %v566 = vmul.f32 %v553, %v562
      %v567 = vmul.f32 %v557, %v563
      %v568 = vmul.f32 %v554, %v562
      %v569 = vmul.f32 %v558, %v563
      %v570 = vmul.f32 %v555, %v562
      %v571 = vmul.f32 %v559, %v563
      %v572 = vmul.f32 %v556, %v562
      %v573 = vmul.f32 %v560, %v563
      %574 = vrot.lane.b32.xlu0 %v306, 112
      %v575 = vpop.permute.xlu0 %574
      %576 = vrot.lane.b32.xlu0 %v308, 112
      %v577 = vpop.permute.xlu0 %576
      %578 = vrot.lane.b32.xlu0 %v310, 112
      %v579 = vpop.permute.xlu0 %578
      %580 = vrot.lane.b32.xlu0 %v312, 112
      %v581 = vpop.permute.xlu0 %580
      %582 = vrot.lane.b32.xlu0 %v307, 112
      %v583 = vpop.permute.xlu0 %582
      %584 = vrot.lane.b32.xlu0 %v309, 112
      %v585 = vpop.permute.xlu0 %584
      %586 = vrot.lane.b32.xlu0 %v311, 112
      %v587 = vpop.permute.xlu0 %586
      %588 = vrot.lane.b32.xlu0 %v313, 112
      %v589 = vpop.permute.xlu0 %588
      %vm590 = vcmp.lt.s32.totalorder %v348, 112
      %v591 = vsel %vm590, %v575, %v583
      %v592 = vsel %vm590, %v577, %v585
      %v593 = vsel %vm590, %v579, %v587
      %v594 = vsel %vm590, %v581, %v589
      %v595 = vsel %vm590, %v583, %v575
      %v596 = vsel %vm590, %v585, %v577
      %v597 = vsel %vm590, %v587, %v579
      %v598 = vsel %vm590, %v589, %v581
      %v600 = vperm.slane %v328, 0
      %v601 = vperm.slane %v328, 1
      %v604 = vmul.f32 %v591, %v600
      %v605 = vmul.f32 %v595, %v601
      %v606 = vmul.f32 %v592, %v600
      %v607 = vmul.f32 %v596, %v601
      %v608 = vmul.f32 %v593, %v600
      %v609 = vmul.f32 %v597, %v601
      %v610 = vmul.f32 %v594, %v600
      %v611 = vmul.f32 %v598, %v601
      %612 = vrot.lane.b32.xlu0 %v306, 111
      %v613 = vpop.permute.xlu0 %612
      %614 = vrot.lane.b32.xlu0 %v308, 111
      %v615 = vpop.permute.xlu0 %614
      %616 = vrot.lane.b32.xlu0 %v310, 111
      %v617 = vpop.permute.xlu0 %616
      %618 = vrot.lane.b32.xlu0 %v312, 111
      %v619 = vpop.permute.xlu0 %618
      %620 = vrot.lane.b32.xlu0 %v307, 111
      %v621 = vpop.permute.xlu0 %620
      %622 = vrot.lane.b32.xlu0 %v309, 111
      %v623 = vpop.permute.xlu0 %622
      %624 = vrot.lane.b32.xlu0 %v311, 111
      %v625 = vpop.permute.xlu0 %624
      %626 = vrot.lane.b32.xlu0 %v313, 111
      %v627 = vpop.permute.xlu0 %626
      %vm628 = vcmp.lt.s32.totalorder %v348, 111
      %v629 = vsel %vm628, %v613, %v621
      %v630 = vsel %vm628, %v615, %v623
      %v631 = vsel %vm628, %v617, %v625
      %v632 = vsel %vm628, %v619, %v627
      %v633 = vsel %vm628, %v621, %v613
      %v634 = vsel %vm628, %v623, %v615
      %v635 = vsel %vm628, %v625, %v617
      %v636 = vsel %vm628, %v627, %v619
      %v638 = vperm.slane %v330, 0
      %v639 = vperm.slane %v330, 1
      %v642 = vmul.f32 %v629, %v638
      %v643 = vmul.f32 %v633, %v639
      %v644 = vmul.f32 %v630, %v638
      %v645 = vmul.f32 %v634, %v639
      %v646 = vmul.f32 %v631, %v638
      %v647 = vmul.f32 %v635, %v639
      %v648 = vmul.f32 %v632, %v638
      %v649 = vmul.f32 %v636, %v639
      %v650 = vld [vmem:[%s1] sm:$0xff]
      %v651 = vld [vmem:[%s1 + $0x8] sm:$0xff]
      %v652 = vld [vmem:[%s1 + $0x10] sm:$0xff]
      %v653 = vld [vmem:[%s1 + $0x18] sm:$0xff]
      %v654 = vld [vmem:[%s1 + $0x20] sm:$0xff]
      %v655 = vld [vmem:[%s1 + $0x28] sm:$0xff]
      %v656 = vld [vmem:[%s1 + $0x30] sm:$0xff]
      %v657 = vld [vmem:[%s1 + $0x38] sm:$0xff]
      %v658 = vld [vmem:[%s1 + $0x40] sm:$0xff]
      %v659 = vld [vmem:[%s1 + $0x48] sm:$0xff]
      %v660 = vld [vmem:[%s1 + $0x50] sm:$0xff]
      %v661 = vld [vmem:[%s1 + $0x58] sm:$0xff]
      %vm662 = vcmask 261120
      %v664 = vsel %vm662, %v652, 0
      %v667 = vsel %vm662, %v655, 0
      %v670 = vsel %vm662, %v658, 0
      %v673 = vsel %vm662, %v661, 0
      %675 = vmatpush.msra.mxu0 %v483
      %676 = vmatpush.msra.mxu0 %v481
      %677 = vmatpush.msra.mxu0 %v479
      %678 = vmatpush.msra.mxu0 %v477
      %679 = vmatpush.msra.mxu0 %v445
      %680 = vmatpush.msra.mxu0 %v443
      %681 = vmatpush.msra.mxu0 %v441
      %682 = vmatpush.msra.mxu0 %v439
      %683 = vmatpush.msra.mxu0 %v407
      %684 = vmatpush.msra.mxu0 %v405
      %685 = vmatpush.msra.mxu0 %v403
      %686 = vmatpush.msra.mxu0 %v401
      %687 = vmatpush.msra.mxu0 %v369
      %688 = vmatpush.msra.mxu0 %v367
      %689 = vmatpush.msra.mxu0 %v365
      %690 = vmatpush.msra.mxu0 %v363
      %691 = vmatmul.f32.gmra.mxu0 %v650
      %v692 = vpop.f32.mrf.mxu0
      %v693 = vadd.f32 0.0, %v692
      %694 = vmatmul.f32.gmra.mxu0 %v653
      %v695 = vpop.f32.mrf.mxu0
      %v696 = vadd.f32 0.0, %v695
      %697 = vmatmul.f32.gmra.mxu0 %v656
      %v698 = vpop.f32.mrf.mxu0
      %v699 = vadd.f32 0.0, %v698
      %700 = vmatmul.f32.gmra.mxu0 %v659
      %v701 = vpop.f32.mrf.mxu0
      %v702 = vadd.f32 0.0, %v701
      %703 = vdwg.mxu0
      %704 = vmatpush.msra.mxu0 %v610
      %705 = vmatpush.msra.mxu0 %v608
      %706 = vmatpush.msra.mxu0 %v606
      %707 = vmatpush.msra.mxu0 %v604
      %708 = vmatpush.msra.mxu0 %v572
      %709 = vmatpush.msra.mxu0 %v570
      %710 = vmatpush.msra.mxu0 %v568
      %711 = vmatpush.msra.mxu0 %v566
      %712 = vmatpush.msra.mxu0 %v534
      %713 = vmatpush.msra.mxu0 %v532
      %714 = vmatpush.msra.mxu0 %v530
      %715 = vmatpush.msra.mxu0 %v528
      %716 = vmatpush.msra.mxu0 %v496
      %717 = vmatpush.msra.mxu0 %v494
      %718 = vmatpush.msra.mxu0 %v492
      %719 = vmatpush.msra.mxu0 %v490
      %720 = vmatmul.f32.gmra.mxu0 %v651
      %v721 = vpop.f32.mrf.mxu0
      %v722 = vadd.f32 %v693, %v721
      %723 = vmatmul.f32.gmra.mxu0 %v654
      %v724 = vpop.f32.mrf.mxu0
      %v725 = vadd.f32 %v696, %v724
      %726 = vmatmul.f32.gmra.mxu0 %v657
      %v727 = vpop.f32.mrf.mxu0
      %v728 = vadd.f32 %v699, %v727
      %729 = vmatmul.f32.gmra.mxu0 %v660
      %v730 = vpop.f32.mrf.mxu0
      %v731 = vadd.f32 %v702, %v730
      %732 = vdwg.mxu0
      %733 = vmatpush.msra.mxu0 0.0
      %734 = vmatpush.msra.mxu0 0.0
      %735 = vmatpush.msra.mxu0 0.0
      %736 = vmatpush.msra.mxu0 0.0
      %737 = vmatpush.msra.mxu0 0.0
      %738 = vmatpush.msra.mxu0 0.0
      %739 = vmatpush.msra.mxu0 0.0
      %740 = vmatpush.msra.mxu0 0.0
      %741 = vmatpush.msra.mxu0 0.0
      %742 = vmatpush.msra.mxu0 0.0
      %743 = vmatpush.msra.mxu0 0.0
      %744 = vmatpush.msra.mxu0 0.0
      %745 = vmatpush.msra.mxu0 %v648
      %746 = vmatpush.msra.mxu0 %v646
      %747 = vmatpush.msra.mxu0 %v644
      %748 = vmatpush.msra.mxu0 %v642
      %749 = vmatmul.f32.gmra.mxu0 %v664
      %v750 = vpop.f32.mrf.mxu0
      %v751 = vadd.f32 %v722, %v750
      %752 = vmatmul.f32.gmra.mxu0 %v667
      %v753 = vpop.f32.mrf.mxu0
      %v754 = vadd.f32 %v725, %v753
      %755 = vmatmul.f32.gmra.mxu0 %v670
      %v756 = vpop.f32.mrf.mxu0
      %v757 = vadd.f32 %v728, %v756
      %758 = vmatmul.f32.gmra.mxu0 %v673
      %v759 = vpop.f32.mrf.mxu0
      %v760 = vadd.f32 %v731, %v759
      %761 = vdwg.mxu0
      %762 = vmatpush.msra.mxu0 %v484
      %763 = vmatpush.msra.mxu0 %v482
      %764 = vmatpush.msra.mxu0 %v480
      %765 = vmatpush.msra.mxu0 %v478
      %766 = vmatpush.msra.mxu0 %v446
      %767 = vmatpush.msra.mxu0 %v444
      %768 = vmatpush.msra.mxu0 %v442
      %769 = vmatpush.msra.mxu0 %v440
      %770 = vmatpush.msra.mxu0 %v408
      %771 = vmatpush.msra.mxu0 %v406
      %772 = vmatpush.msra.mxu0 %v404
      %773 = vmatpush.msra.mxu0 %v402
      %774 = vmatpush.msra.mxu0 %v370
      %775 = vmatpush.msra.mxu0 %v368
      %776 = vmatpush.msra.mxu0 %v366
      %777 = vmatpush.msra.mxu0 %v364
      %778 = vmatmul.f32.gmra.mxu0 %v650
      %v779 = vpop.f32.mrf.mxu0
      %v780 = vadd.f32 0.0, %v779
      %781 = vmatmul.f32.gmra.mxu0 %v653
      %v782 = vpop.f32.mrf.mxu0
      %v783 = vadd.f32 0.0, %v782
      %784 = vmatmul.f32.gmra.mxu0 %v656
      %v785 = vpop.f32.mrf.mxu0
      %v786 = vadd.f32 0.0, %v785
      %787 = vmatmul.f32.gmra.mxu0 %v659
      %v788 = vpop.f32.mrf.mxu0
      %v789 = vadd.f32 0.0, %v788
      %790 = vdwg.mxu0
      %791 = vmatpush.msra.mxu0 %v611
      %792 = vmatpush.msra.mxu0 %v609
      %793 = vmatpush.msra.mxu0 %v607
      %794 = vmatpush.msra.mxu0 %v605
      %795 = vmatpush.msra.mxu0 %v573
      %796 = vmatpush.msra.mxu0 %v571
      %797 = vmatpush.msra.mxu0 %v569
      %798 = vmatpush.msra.mxu0 %v567
      %799 = vmatpush.msra.mxu0 %v535
      %800 = vmatpush.msra.mxu0 %v533
      %801 = vmatpush.msra.mxu0 %v531
      %802 = vmatpush.msra.mxu0 %v529
      %803 = vmatpush.msra.mxu0 %v497
      %804 = vmatpush.msra.mxu0 %v495
      %805 = vmatpush.msra.mxu0 %v493
      %806 = vmatpush.msra.mxu0 %v491
      %807 = vmatmul.f32.gmra.mxu0 %v651
      %v808 = vpop.f32.mrf.mxu0
      %v809 = vadd.f32 %v780, %v808
      %810 = vmatmul.f32.gmra.mxu0 %v654
      %v811 = vpop.f32.mrf.mxu0
      %v812 = vadd.f32 %v783, %v811
      %813 = vmatmul.f32.gmra.mxu0 %v657
      %v814 = vpop.f32.mrf.mxu0
      %v815 = vadd.f32 %v786, %v814
      %816 = vmatmul.f32.gmra.mxu0 %v660
      %v817 = vpop.f32.mrf.mxu0
      %v818 = vadd.f32 %v789, %v817
      %819 = vdwg.mxu0
      %820 = vmatpush.msra.mxu0 0.0
      %821 = vmatpush.msra.mxu0 0.0
      %822 = vmatpush.msra.mxu0 0.0
      %823 = vmatpush.msra.mxu0 0.0
      %824 = vmatpush.msra.mxu0 0.0
      %825 = vmatpush.msra.mxu0 0.0
      %826 = vmatpush.msra.mxu0 0.0
      %827 = vmatpush.msra.mxu0 0.0
      %828 = vmatpush.msra.mxu0 0.0
      %829 = vmatpush.msra.mxu0 0.0
      %830 = vmatpush.msra.mxu0 0.0
      %831 = vmatpush.msra.mxu0 0.0
      %832 = vmatpush.msra.mxu0 %v649
      %833 = vmatpush.msra.mxu0 %v647
      %834 = vmatpush.msra.mxu0 %v645
      %835 = vmatpush.msra.mxu0 %v643
      %836 = vmatmul.f32.gmra.mxu0 %v664
      %v837 = vpop.f32.mrf.mxu0
      %v838 = vadd.f32 %v809, %v837
      %839 = vmatmul.f32.gmra.mxu0 %v667
      %v840 = vpop.f32.mrf.mxu0
      %v841 = vadd.f32 %v812, %v840
      %842 = vmatmul.f32.gmra.mxu0 %v670
      %v843 = vpop.f32.mrf.mxu0
      %v844 = vadd.f32 %v815, %v843
      %845 = vmatmul.f32.gmra.mxu0 %v673
      %v846 = vpop.f32.mrf.mxu0
      %v847 = vadd.f32 %v818, %v846
      %848 = vdwg.mxu0
      %v849 = vadd.f32 %v751, %v838
      %850 = vadd.xlane.f32.xlu0 %v849
      %v851 = vpop.xlane.xlu0 %850
      %v852 = vadd.f32 %v754, %v841
      %853 = vadd.xlane.f32.xlu0 %v852
      %v854 = vpop.xlane.xlu0 %853
      %v855 = vadd.f32 %v757, %v844
      %856 = vadd.xlane.f32.xlu0 %v855
      %v857 = vpop.xlane.xlu0 %856
      %v858 = vadd.f32 %v760, %v847
      %859 = vadd.xlane.f32.xlu0 %v858
      %v860 = vpop.xlane.xlu0 %859
      %v861 = vrcp.pop 256.0
      %v862 = vmul.f32 256.0, %v861
      %v863 = vsub.f32 1.0, %v862
      %v864 = vmul.f32 %v861, %v863
      %v865 = vadd.f32 %v861, %v864
      %vm866 = vweird.f32 %v861
      %v867 = vsel %vm866, %v861, %v865
      %v868 = vmul.f32 %v851, %v867
      %v869 = vmul.f32 %v854, %v867
      %v870 = vmul.f32 %v857, %v867
      %v871 = vmul.f32 %v860, %v867
      %v872 = vmul.f32 %v751, %v751
      %v873 = vmul.f32 %v838, %v838
      %v874 = vmul.f32 %v754, %v754
      %v875 = vmul.f32 %v841, %v841
      %v876 = vmul.f32 %v757, %v757
      %v877 = vmul.f32 %v844, %v844
      %v878 = vmul.f32 %v760, %v760
      %v879 = vmul.f32 %v847, %v847
      %v880 = vadd.f32 %v872, %v873
      %881 = vadd.xlane.f32.xlu0 %v880
      %v882 = vpop.xlane.xlu0 %881
      %v883 = vadd.f32 %v874, %v875
      %884 = vadd.xlane.f32.xlu0 %v883
      %v885 = vpop.xlane.xlu0 %884
      %v886 = vadd.f32 %v876, %v877
      %887 = vadd.xlane.f32.xlu0 %v886
      %v888 = vpop.xlane.xlu0 %887
      %v889 = vadd.f32 %v878, %v879
      %890 = vadd.xlane.f32.xlu0 %v889
      %v891 = vpop.xlane.xlu0 %890
      %v892 = vmul.f32 %v882, %v867
      %v893 = vmul.f32 %v885, %v867
      %v894 = vmul.f32 %v888, %v867
      %v895 = vmul.f32 %v891, %v867
      %v896 = vmul.f32 %v868, %v868
      %v897 = vmul.f32 %v869, %v869
      %v898 = vmul.f32 %v870, %v870
      %v899 = vmul.f32 %v871, %v871
      %v900 = vsub.f32 %v892, %v896
      %v901 = vsub.f32 %v893, %v897
      %v902 = vsub.f32 %v894, %v898
      %v903 = vsub.f32 %v895, %v899
      %v904 = vld [vmem:[%s2] sm:$0xff]
      %v905 = vld [vmem:[%s2 + $0x8] sm:$0xff]
      %v906 = vld [vmem:[%s2 + $0x10] sm:$0xff]
      %v907 = vld [vmem:[%s2 + $0x18] sm:$0xff]
      %v908 = vadd.f32 %v900, 1e-05
      %v909 = vadd.f32 %v901, 1e-05
      %v910 = vadd.f32 %v902, 1e-05
      %v911 = vadd.f32 %v903, 1e-05
      %v912 = vrsqrt.pop %v908
      %v913 = vmul.f32 %v912, %v908
      %v914 = vmul.f32 %v913, %v912
      %v915 = vmul.f32 0.5, %v914
      %v916 = vsub.f32 1.5, %v915
      %v917 = vmul.f32 %v912, %v916
      %vm918 = vweird.f32 %v908
      %vm919 = vweird.f32 %v912
      %vm920 = vmor %vm918, %vm919
      %v921 = vsel %vm920, %v912, %v917
      %v922 = vrsqrt.pop %v909
      %v923 = vmul.f32 %v922, %v909
      %v924 = vmul.f32 %v923, %v922
      %v925 = vmul.f32 0.5, %v924
      %v926 = vsub.f32 1.5, %v925
      %v927 = vmul.f32 %v922, %v926
      %vm928 = vweird.f32 %v909
      %vm929 = vweird.f32 %v922
      %vm930 = vmor %vm928, %vm929
      %v931 = vsel %vm930, %v922, %v927
      %v932 = vrsqrt.pop %v910
      %v933 = vmul.f32 %v932, %v910
      %v934 = vmul.f32 %v933, %v932
      %v935 = vmul.f32 0.5, %v934
      %v936 = vsub.f32 1.5, %v935
      %v937 = vmul.f32 %v932, %v936
      %vm938 = vweird.f32 %v910
      %vm939 = vweird.f32 %v932
      %vm940 = vmor %vm938, %vm939
      %v941 = vsel %vm940, %v932, %v937
      %v942 = vrsqrt.pop %v911
      %v943 = vmul.f32 %v942, %v911
      %v944 = vmul.f32 %v943, %v942
      %v945 = vmul.f32 0.5, %v944
      %v946 = vsub.f32 1.5, %v945
      %v947 = vmul.f32 %v942, %v946
      %vm948 = vweird.f32 %v911
      %vm949 = vweird.f32 %v942
      %vm950 = vmor %vm948, %vm949
      %v951 = vsel %vm950, %v942, %v947
      %v952 = vmul.f32 %v904, %v921
      %v953 = vmul.f32 %v905, %v931
      %v954 = vmul.f32 %v906, %v941
      %v955 = vmul.f32 %v907, %v951
      %v956 = vld [vmem:[%s3] sm:$0xff]
      %v957 = vld [vmem:[%s3 + $0x8] sm:$0xff]
      %v958 = vld [vmem:[%s3 + $0x10] sm:$0xff]
      %v959 = vld [vmem:[%s3 + $0x18] sm:$0xff]
      %v960 = vmul.f32 %v868, %v952
      %v961 = vmul.f32 %v869, %v953
      %v962 = vmul.f32 %v870, %v954
      %v963 = vmul.f32 %v871, %v955
      %v964 = vsub.f32 %v956, %v960
      %v965 = vsub.f32 %v957, %v961
      %v966 = vsub.f32 %v958, %v962
      %v967 = vsub.f32 %v959, %v963
      %969 = vset.pattern.permute.xlu0 0
      %970 = vperm.xlu0 %969, %v952
      %v971 = vpop.permute.xlu0 %970
      %974 = vset.pattern.permute.xlu0 0
      %975 = vperm.xlu0 %974, %v953
      %v976 = vpop.permute.xlu0 %975
      %979 = vset.pattern.permute.xlu0 0
      %980 = vperm.xlu0 %979, %v954
      %v981 = vpop.permute.xlu0 %980
      %984 = vset.pattern.permute.xlu0 0
      %985 = vperm.xlu0 %984, %v955
      %v986 = vpop.permute.xlu0 %985
      %v988 = vmul.f32 %v751, %v971
      %v989 = vmul.f32 %v838, %v971
      %v990 = vmul.f32 %v754, %v976
      %v991 = vmul.f32 %v841, %v976
      %v992 = vmul.f32 %v757, %v981
      %v993 = vmul.f32 %v844, %v981
      %v994 = vmul.f32 %v760, %v986
      %v995 = vmul.f32 %v847, %v986
      %997 = vset.pattern.permute.xlu0 0
      %998 = vperm.xlu0 %997, %v964
      %v999 = vpop.permute.xlu0 %998
      %1002 = vset.pattern.permute.xlu0 0
      %1003 = vperm.xlu0 %1002, %v965
      %v1004 = vpop.permute.xlu0 %1003
      %1007 = vset.pattern.permute.xlu0 0
      %1008 = vperm.xlu0 %1007, %v966
      %v1009 = vpop.permute.xlu0 %1008
      %1012 = vset.pattern.permute.xlu0 0
      %1013 = vperm.xlu0 %1012, %v967
      %v1014 = vpop.permute.xlu0 %1013
      %v1016 = vadd.f32 %v988, %v999
      %v1017 = vadd.f32 %v989, %v999
      %v1018 = vadd.f32 %v990, %v1004
      %v1019 = vadd.f32 %v991, %v1004
      %v1020 = vadd.f32 %v992, %v1009
      %v1021 = vadd.f32 %v993, %v1009
      %v1022 = vadd.f32 %v994, %v1014
      %v1023 = vadd.f32 %v995, %v1014
      %v1024 = vmax.f32 %v1016, 0.0
      %v1025 = vmax.f32 %v1017, 0.0
      %v1026 = vmax.f32 %v1018, 0.0
      %v1027 = vmax.f32 %v1019, 0.0
      %v1028 = vmax.f32 %v1020, 0.0
      %v1029 = vmax.f32 %v1021, 0.0
      %v1030 = vmax.f32 %v1022, 0.0
      %v1031 = vmax.f32 %v1023, 0.0
      %1032 = vrot.lane.b32.xlu0 %v1024, 17
      %v1033 = vpop.permute.xlu0 %1032
      %1034 = vrot.lane.b32.xlu0 %v1026, 17
      %v1035 = vpop.permute.xlu0 %1034
      %1036 = vrot.lane.b32.xlu0 %v1028, 17
      %v1037 = vpop.permute.xlu0 %1036
      %1038 = vrot.lane.b32.xlu0 %v1030, 17
      %v1039 = vpop.permute.xlu0 %1038
      %1040 = vrot.lane.b32.xlu0 %v1025, 17
      %v1041 = vpop.permute.xlu0 %1040
      %1042 = vrot.lane.b32.xlu0 %v1027, 17
      %v1043 = vpop.permute.xlu0 %1042
      %1044 = vrot.lane.b32.xlu0 %v1029, 17
      %v1045 = vpop.permute.xlu0 %1044
      %1046 = vrot.lane.b32.xlu0 %v1031, 17
      %v1047 = vpop.permute.xlu0 %1046
      %v1048 = vsel %vm349, %v1033, %v1041
      %v1049 = vsel %vm349, %v1035, %v1043
      %v1050 = vsel %vm349, %v1037, %v1045
      %v1051 = vsel %vm349, %v1039, %v1047
      %v1052 = vsel %vm349, %v1041, %v1033
      %v1053 = vsel %vm349, %v1043, %v1035
      %v1054 = vsel %vm349, %v1045, %v1037
      %v1055 = vsel %vm349, %v1047, %v1039
      %v1056 = vmul.f32 %v1052, %v359
      %v1057 = vmul.f32 %v1048, %v360
      %v1058 = vmul.f32 %v1053, %v359
      %v1059 = vmul.f32 %v1049, %v360
      %v1060 = vmul.f32 %v1054, %v359
      %v1061 = vmul.f32 %v1050, %v360
      %v1062 = vmul.f32 %v1055, %v359
      %v1063 = vmul.f32 %v1051, %v360
      %1064 = vrot.lane.b32.xlu0 %v1024, 16
      %v1065 = vpop.permute.xlu0 %1064
      %1066 = vrot.lane.b32.xlu0 %v1026, 16
      %v1067 = vpop.permute.xlu0 %1066
      %1068 = vrot.lane.b32.xlu0 %v1028, 16
      %v1069 = vpop.permute.xlu0 %1068
      %1070 = vrot.lane.b32.xlu0 %v1030, 16
      %v1071 = vpop.permute.xlu0 %1070
      %1072 = vrot.lane.b32.xlu0 %v1025, 16
      %v1073 = vpop.permute.xlu0 %1072
      %1074 = vrot.lane.b32.xlu0 %v1027, 16
      %v1075 = vpop.permute.xlu0 %1074
      %1076 = vrot.lane.b32.xlu0 %v1029, 16
      %v1077 = vpop.permute.xlu0 %1076
      %1078 = vrot.lane.b32.xlu0 %v1031, 16
      %v1079 = vpop.permute.xlu0 %1078
      %v1080 = vsel %vm387, %v1065, %v1073
      %v1081 = vsel %vm387, %v1067, %v1075
      %v1082 = vsel %vm387, %v1069, %v1077
      %v1083 = vsel %vm387, %v1071, %v1079
      %v1084 = vsel %vm387, %v1073, %v1065
      %v1085 = vsel %vm387, %v1075, %v1067
      %v1086 = vsel %vm387, %v1077, %v1069
      %v1087 = vsel %vm387, %v1079, %v1071
      %v1088 = vmul.f32 %v1084, %v397
      %v1089 = vmul.f32 %v1080, %v398
      %v1090 = vmul.f32 %v1085, %v397
      %v1091 = vmul.f32 %v1081, %v398
      %v1092 = vmul.f32 %v1086, %v397
      %v1093 = vmul.f32 %v1082, %v398
      %v1094 = vmul.f32 %v1087, %v397
      %v1095 = vmul.f32 %v1083, %v398
      %1096 = vrot.lane.b32.xlu0 %v1024, 15
      %v1097 = vpop.permute.xlu0 %1096
      %1098 = vrot.lane.b32.xlu0 %v1026, 15
      %v1099 = vpop.permute.xlu0 %1098
      %1100 = vrot.lane.b32.xlu0 %v1028, 15
      %v1101 = vpop.permute.xlu0 %1100
      %1102 = vrot.lane.b32.xlu0 %v1030, 15
      %v1103 = vpop.permute.xlu0 %1102
      %1104 = vrot.lane.b32.xlu0 %v1025, 15
      %v1105 = vpop.permute.xlu0 %1104
      %1106 = vrot.lane.b32.xlu0 %v1027, 15
      %v1107 = vpop.permute.xlu0 %1106
      %1108 = vrot.lane.b32.xlu0 %v1029, 15
      %v1109 = vpop.permute.xlu0 %1108
      %1110 = vrot.lane.b32.xlu0 %v1031, 15
      %v1111 = vpop.permute.xlu0 %1110
      %v1112 = vsel %vm425, %v1097, %v1105
      %v1113 = vsel %vm425, %v1099, %v1107
      %v1114 = vsel %vm425, %v1101, %v1109
      %v1115 = vsel %vm425, %v1103, %v1111
      %v1116 = vsel %vm425, %v1105, %v1097
      %v1117 = vsel %vm425, %v1107, %v1099
      %v1118 = vsel %vm425, %v1109, %v1101
      %v1119 = vsel %vm425, %v1111, %v1103
      %v1120 = vmul.f32 %v1116, %v435
      %v1121 = vmul.f32 %v1112, %v436
      %v1122 = vmul.f32 %v1117, %v435
      %v1123 = vmul.f32 %v1113, %v436
      %v1124 = vmul.f32 %v1118, %v435
      %v1125 = vmul.f32 %v1114, %v436
      %v1126 = vmul.f32 %v1119, %v435
      %v1127 = vmul.f32 %v1115, %v436
      %1128 = vrot.lane.b32.xlu0 %v1024, 1
      %v1129 = vpop.permute.xlu0 %1128
      %1130 = vrot.lane.b32.xlu0 %v1026, 1
      %v1131 = vpop.permute.xlu0 %1130
      %1132 = vrot.lane.b32.xlu0 %v1028, 1
      %v1133 = vpop.permute.xlu0 %1132
      %1134 = vrot.lane.b32.xlu0 %v1030, 1
      %v1135 = vpop.permute.xlu0 %1134
      %1136 = vrot.lane.b32.xlu0 %v1025, 1
      %v1137 = vpop.permute.xlu0 %1136
      %1138 = vrot.lane.b32.xlu0 %v1027, 1
      %v1139 = vpop.permute.xlu0 %1138
      %1140 = vrot.lane.b32.xlu0 %v1029, 1
      %v1141 = vpop.permute.xlu0 %1140
      %1142 = vrot.lane.b32.xlu0 %v1031, 1
      %v1143 = vpop.permute.xlu0 %1142
      %v1144 = vsel %vm463, %v1129, %v1137
      %v1145 = vsel %vm463, %v1131, %v1139
      %v1146 = vsel %vm463, %v1133, %v1141
      %v1147 = vsel %vm463, %v1135, %v1143
      %v1148 = vsel %vm463, %v1137, %v1129
      %v1149 = vsel %vm463, %v1139, %v1131
      %v1150 = vsel %vm463, %v1141, %v1133
      %v1151 = vsel %vm463, %v1143, %v1135
      %v1152 = vmul.f32 %v1148, %v473
      %v1153 = vmul.f32 %v1144, %v474
      %v1154 = vmul.f32 %v1149, %v473
      %v1155 = vmul.f32 %v1145, %v474
      %v1156 = vmul.f32 %v1150, %v473
      %v1157 = vmul.f32 %v1146, %v474
      %v1158 = vmul.f32 %v1151, %v473
      %v1159 = vmul.f32 %v1147, %v474
      %v1160 = vmul.f32 %v1024, %v486
      %v1161 = vmul.f32 %v1025, %v487
      %v1162 = vmul.f32 %v1026, %v486
      %v1163 = vmul.f32 %v1027, %v487
      %v1164 = vmul.f32 %v1028, %v486
      %v1165 = vmul.f32 %v1029, %v487
      %v1166 = vmul.f32 %v1030, %v486
      %v1167 = vmul.f32 %v1031, %v487
      %1168 = vrot.lane.b32.xlu0 %v1024, 127
      %v1169 = vpop.permute.xlu0 %1168
      %1170 = vrot.lane.b32.xlu0 %v1026, 127
      %v1171 = vpop.permute.xlu0 %1170
      %1172 = vrot.lane.b32.xlu0 %v1028, 127
      %v1173 = vpop.permute.xlu0 %1172
      %1174 = vrot.lane.b32.xlu0 %v1030, 127
      %v1175 = vpop.permute.xlu0 %1174
      %1176 = vrot.lane.b32.xlu0 %v1025, 127
      %v1177 = vpop.permute.xlu0 %1176
      %1178 = vrot.lane.b32.xlu0 %v1027, 127
      %v1179 = vpop.permute.xlu0 %1178
      %1180 = vrot.lane.b32.xlu0 %v1029, 127
      %v1181 = vpop.permute.xlu0 %1180
      %1182 = vrot.lane.b32.xlu0 %v1031, 127
      %v1183 = vpop.permute.xlu0 %1182
      %v1184 = vsel %vm514, %v1169, %v1177
      %v1185 = vsel %vm514, %v1171, %v1179
      %v1186 = vsel %vm514, %v1173, %v1181
      %v1187 = vsel %vm514, %v1175, %v1183
      %v1188 = vsel %vm514, %v1177, %v1169
      %v1189 = vsel %vm514, %v1179, %v1171
      %v1190 = vsel %vm514, %v1181, %v1173
      %v1191 = vsel %vm514, %v1183, %v1175
      %v1192 = vmul.f32 %v1184, %v524
      %v1193 = vmul.f32 %v1188, %v525
      %v1194 = vmul.f32 %v1185, %v524
      %v1195 = vmul.f32 %v1189, %v525
      %v1196 = vmul.f32 %v1186, %v524
      %v1197 = vmul.f32 %v1190, %v525
      %v1198 = vmul.f32 %v1187, %v524
      %v1199 = vmul.f32 %v1191, %v525
      %1200 = vrot.lane.b32.xlu0 %v1024, 113
      %v1201 = vpop.permute.xlu0 %1200
      %1202 = vrot.lane.b32.xlu0 %v1026, 113
      %v1203 = vpop.permute.xlu0 %1202
      %1204 = vrot.lane.b32.xlu0 %v1028, 113
      %v1205 = vpop.permute.xlu0 %1204
      %1206 = vrot.lane.b32.xlu0 %v1030, 113
      %v1207 = vpop.permute.xlu0 %1206
      %1208 = vrot.lane.b32.xlu0 %v1025, 113
      %v1209 = vpop.permute.xlu0 %1208
      %1210 = vrot.lane.b32.xlu0 %v1027, 113
      %v1211 = vpop.permute.xlu0 %1210
      %1212 = vrot.lane.b32.xlu0 %v1029, 113
      %v1213 = vpop.permute.xlu0 %1212
      %1214 = vrot.lane.b32.xlu0 %v1031, 113
      %v1215 = vpop.permute.xlu0 %1214
      %v1216 = vsel %vm552, %v1201, %v1209
      %v1217 = vsel %vm552, %v1203, %v1211
      %v1218 = vsel %vm552, %v1205, %v1213
      %v1219 = vsel %vm552, %v1207, %v1215
      %v1220 = vsel %vm552, %v1209, %v1201
      %v1221 = vsel %vm552, %v1211, %v1203
      %v1222 = vsel %vm552, %v1213, %v1205
      %v1223 = vsel %vm552, %v1215, %v1207
      %v1224 = vmul.f32 %v1216, %v562
      %v1225 = vmul.f32 %v1220, %v563
      %v1226 = vmul.f32 %v1217, %v562
      %v1227 = vmul.f32 %v1221, %v563
      %v1228 = vmul.f32 %v1218, %v562
      %v1229 = vmul.f32 %v1222, %v563
      %v1230 = vmul.f32 %v1219, %v562
      %v1231 = vmul.f32 %v1223, %v563
      %1232 = vrot.lane.b32.xlu0 %v1024, 112
      %v1233 = vpop.permute.xlu0 %1232
      %1234 = vrot.lane.b32.xlu0 %v1026, 112
      %v1235 = vpop.permute.xlu0 %1234
      %1236 = vrot.lane.b32.xlu0 %v1028, 112
      %v1237 = vpop.permute.xlu0 %1236
      %1238 = vrot.lane.b32.xlu0 %v1030, 112
      %v1239 = vpop.permute.xlu0 %1238
      %1240 = vrot.lane.b32.xlu0 %v1025, 112
      %v1241 = vpop.permute.xlu0 %1240
      %1242 = vrot.lane.b32.xlu0 %v1027, 112
      %v1243 = vpop.permute.xlu0 %1242
      %1244 = vrot.lane.b32.xlu0 %v1029, 112
      %v1245 = vpop.permute.xlu0 %1244
      %1246 = vrot.lane.b32.xlu0 %v1031, 112
      %v1247 = vpop.permute.xlu0 %1246
      %v1248 = vsel %vm590, %v1233, %v1241
      %v1249 = vsel %vm590, %v1235, %v1243
      %v1250 = vsel %vm590, %v1237, %v1245
      %v1251 = vsel %vm590, %v1239, %v1247
      %v1252 = vsel %vm590, %v1241, %v1233
      %v1253 = vsel %vm590, %v1243, %v1235
      %v1254 = vsel %vm590, %v1245, %v1237
      %v1255 = vsel %vm590, %v1247, %v1239
      %v1256 = vmul.f32 %v1248, %v600
      %v1257 = vmul.f32 %v1252, %v601
      %v1258 = vmul.f32 %v1249, %v600
      %v1259 = vmul.f32 %v1253, %v601
      %v1260 = vmul.f32 %v1250, %v600
      %v1261 = vmul.f32 %v1254, %v601
      %v1262 = vmul.f32 %v1251, %v600
      %v1263 = vmul.f32 %v1255, %v601
      %1264 = vrot.lane.b32.xlu0 %v1024, 111
      %v1265 = vpop.permute.xlu0 %1264
      %1266 = vrot.lane.b32.xlu0 %v1026, 111
      %v1267 = vpop.permute.xlu0 %1266
      %1268 = vrot.lane.b32.xlu0 %v1028, 111
      %v1269 = vpop.permute.xlu0 %1268
      %1270 = vrot.lane.b32.xlu0 %v1030, 111
      %v1271 = vpop.permute.xlu0 %1270
      %1272 = vrot.lane.b32.xlu0 %v1025, 111
      %v1273 = vpop.permute.xlu0 %1272
      %1274 = vrot.lane.b32.xlu0 %v1027, 111
      %v1275 = vpop.permute.xlu0 %1274
      %1276 = vrot.lane.b32.xlu0 %v1029, 111
      %v1277 = vpop.permute.xlu0 %1276
      %1278 = vrot.lane.b32.xlu0 %v1031, 111
      %v1279 = vpop.permute.xlu0 %1278
      %v1280 = vsel %vm628, %v1265, %v1273
      %v1281 = vsel %vm628, %v1267, %v1275
      %v1282 = vsel %vm628, %v1269, %v1277
      %v1283 = vsel %vm628, %v1271, %v1279
      %v1284 = vsel %vm628, %v1273, %v1265
      %v1285 = vsel %vm628, %v1275, %v1267
      %v1286 = vsel %vm628, %v1277, %v1269
      %v1287 = vsel %vm628, %v1279, %v1271
      %v1288 = vmul.f32 %v1280, %v638
      %v1289 = vmul.f32 %v1284, %v639
      %v1290 = vmul.f32 %v1281, %v638
      %v1291 = vmul.f32 %v1285, %v639
      %v1292 = vmul.f32 %v1282, %v638
      %v1293 = vmul.f32 %v1286, %v639
      %v1294 = vmul.f32 %v1283, %v638
      %v1295 = vmul.f32 %v1287, %v639
      %v1296 = vld [vmem:[%s4] sm:$0xff]
      %v1297 = vld [vmem:[%s4 + $0x8] sm:$0xff]
      %v1298 = vld [vmem:[%s4 + $0x10] sm:$0xff]
      %v1299 = vld [vmem:[%s4 + $0x18] sm:$0xff]
      %v1300 = vld [vmem:[%s4 + $0x20] sm:$0xff]
      %v1301 = vld [vmem:[%s4 + $0x28] sm:$0xff]
      %v1302 = vld [vmem:[%s4 + $0x30] sm:$0xff]
      %v1303 = vld [vmem:[%s4 + $0x38] sm:$0xff]
      %v1304 = vld [vmem:[%s4 + $0x40] sm:$0xff]
      %v1305 = vld [vmem:[%s4 + $0x48] sm:$0xff]
      %v1306 = vld [vmem:[%s4 + $0x50] sm:$0xff]
      %v1307 = vld [vmem:[%s4 + $0x58] sm:$0xff]
      %v1309 = vsel %vm662, %v1298, 0
      %v1312 = vsel %vm662, %v1301, 0
      %v1315 = vsel %vm662, %v1304, 0
      %v1318 = vsel %vm662, %v1307, 0
      %1320 = vmatpush.msra.mxu0 %v1158
      %1321 = vmatpush.msra.mxu0 %v1156
      %1322 = vmatpush.msra.mxu0 %v1154
      %1323 = vmatpush.msra.mxu0 %v1152
      %1324 = vmatpush.msra.mxu0 %v1126
      %1325 = vmatpush.msra.mxu0 %v1124
      %1326 = vmatpush.msra.mxu0 %v1122
      %1327 = vmatpush.msra.mxu0 %v1120
      %1328 = vmatpush.msra.mxu0 %v1094
      %1329 = vmatpush.msra.mxu0 %v1092
      %1330 = vmatpush.msra.mxu0 %v1090
      %1331 = vmatpush.msra.mxu0 %v1088
      %1332 = vmatpush.msra.mxu0 %v1062
      %1333 = vmatpush.msra.mxu0 %v1060
      %1334 = vmatpush.msra.mxu0 %v1058
      %1335 = vmatpush.msra.mxu0 %v1056
      %1336 = vmatmul.f32.gmra.mxu0 %v1296
      %v1337 = vpop.f32.mrf.mxu0
      %v1338 = vadd.f32 0.0, %v1337
      %1339 = vmatmul.f32.gmra.mxu0 %v1299
      %v1340 = vpop.f32.mrf.mxu0
      %v1341 = vadd.f32 0.0, %v1340
      %1342 = vmatmul.f32.gmra.mxu0 %v1302
      %v1343 = vpop.f32.mrf.mxu0
      %v1344 = vadd.f32 0.0, %v1343
      %1345 = vmatmul.f32.gmra.mxu0 %v1305
      %v1346 = vpop.f32.mrf.mxu0
      %v1347 = vadd.f32 0.0, %v1346
      %1348 = vdwg.mxu0
      %1349 = vmatpush.msra.mxu0 %v1262
      %1350 = vmatpush.msra.mxu0 %v1260
      %1351 = vmatpush.msra.mxu0 %v1258
      %1352 = vmatpush.msra.mxu0 %v1256
      %1353 = vmatpush.msra.mxu0 %v1230
      %1354 = vmatpush.msra.mxu0 %v1228
      %1355 = vmatpush.msra.mxu0 %v1226
      %1356 = vmatpush.msra.mxu0 %v1224
      %1357 = vmatpush.msra.mxu0 %v1198
      %1358 = vmatpush.msra.mxu0 %v1196
      %1359 = vmatpush.msra.mxu0 %v1194
      %1360 = vmatpush.msra.mxu0 %v1192
      %1361 = vmatpush.msra.mxu0 %v1166
      %1362 = vmatpush.msra.mxu0 %v1164
      %1363 = vmatpush.msra.mxu0 %v1162
      %1364 = vmatpush.msra.mxu0 %v1160
      %1365 = vmatmul.f32.gmra.mxu0 %v1297
      %v1366 = vpop.f32.mrf.mxu0
      %v1367 = vadd.f32 %v1338, %v1366
      %1368 = vmatmul.f32.gmra.mxu0 %v1300
      %v1369 = vpop.f32.mrf.mxu0
      %v1370 = vadd.f32 %v1341, %v1369
      %1371 = vmatmul.f32.gmra.mxu0 %v1303
      %v1372 = vpop.f32.mrf.mxu0
      %v1373 = vadd.f32 %v1344, %v1372
      %1374 = vmatmul.f32.gmra.mxu0 %v1306
      %v1375 = vpop.f32.mrf.mxu0
      %v1376 = vadd.f32 %v1347, %v1375
      %1377 = vdwg.mxu0
      %1378 = vmatpush.msra.mxu0 0.0
      %1379 = vmatpush.msra.mxu0 0.0
      %1380 = vmatpush.msra.mxu0 0.0
      %1381 = vmatpush.msra.mxu0 0.0
      %1382 = vmatpush.msra.mxu0 0.0
      %1383 = vmatpush.msra.mxu0 0.0
      %1384 = vmatpush.msra.mxu0 0.0
      %1385 = vmatpush.msra.mxu0 0.0
      %1386 = vmatpush.msra.mxu0 0.0
      %1387 = vmatpush.msra.mxu0 0.0
      %1388 = vmatpush.msra.mxu0 0.0
      %1389 = vmatpush.msra.mxu0 0.0
      %1390 = vmatpush.msra.mxu0 %v1294
      %1391 = vmatpush.msra.mxu0 %v1292
      %1392 = vmatpush.msra.mxu0 %v1290
      %1393 = vmatpush.msra.mxu0 %v1288
      %1394 = vmatmul.f32.gmra.mxu0 %v1309
      %v1395 = vpop.f32.mrf.mxu0
      %v1396 = vadd.f32 %v1367, %v1395
      %1397 = vmatmul.f32.gmra.mxu0 %v1312
      %v1398 = vpop.f32.mrf.mxu0
      %v1399 = vadd.f32 %v1370, %v1398
      %1400 = vmatmul.f32.gmra.mxu0 %v1315
      %v1401 = vpop.f32.mrf.mxu0
      %v1402 = vadd.f32 %v1373, %v1401
      %1403 = vmatmul.f32.gmra.mxu0 %v1318
      %v1404 = vpop.f32.mrf.mxu0
      %v1405 = vadd.f32 %v1376, %v1404
      %1406 = vdwg.mxu0
      %1407 = vmatpush.msra.mxu0 %v1159
      %1408 = vmatpush.msra.mxu0 %v1157
      %1409 = vmatpush.msra.mxu0 %v1155
      %1410 = vmatpush.msra.mxu0 %v1153
      %1411 = vmatpush.msra.mxu0 %v1127
      %1412 = vmatpush.msra.mxu0 %v1125
      %1413 = vmatpush.msra.mxu0 %v1123
      %1414 = vmatpush.msra.mxu0 %v1121
      %1415 = vmatpush.msra.mxu0 %v1095
      %1416 = vmatpush.msra.mxu0 %v1093
      %1417 = vmatpush.msra.mxu0 %v1091
      %1418 = vmatpush.msra.mxu0 %v1089
      %1419 = vmatpush.msra.mxu0 %v1063
      %1420 = vmatpush.msra.mxu0 %v1061
      %1421 = vmatpush.msra.mxu0 %v1059
      %1422 = vmatpush.msra.mxu0 %v1057
      %1423 = vmatmul.f32.gmra.mxu0 %v1296
      %v1424 = vpop.f32.mrf.mxu0
      %v1425 = vadd.f32 0.0, %v1424
      %1426 = vmatmul.f32.gmra.mxu0 %v1299
      %v1427 = vpop.f32.mrf.mxu0
      %v1428 = vadd.f32 0.0, %v1427
      %1429 = vmatmul.f32.gmra.mxu0 %v1302
      %v1430 = vpop.f32.mrf.mxu0
      %v1431 = vadd.f32 0.0, %v1430
      %1432 = vmatmul.f32.gmra.mxu0 %v1305
      %v1433 = vpop.f32.mrf.mxu0
      %v1434 = vadd.f32 0.0, %v1433
      %1435 = vdwg.mxu0
      %1436 = vmatpush.msra.mxu0 %v1263
      %1437 = vmatpush.msra.mxu0 %v1261
      %1438 = vmatpush.msra.mxu0 %v1259
      %1439 = vmatpush.msra.mxu0 %v1257
      %1440 = vmatpush.msra.mxu0 %v1231
      %1441 = vmatpush.msra.mxu0 %v1229
      %1442 = vmatpush.msra.mxu0 %v1227
      %1443 = vmatpush.msra.mxu0 %v1225
      %1444 = vmatpush.msra.mxu0 %v1199
      %1445 = vmatpush.msra.mxu0 %v1197
      %1446 = vmatpush.msra.mxu0 %v1195
      %1447 = vmatpush.msra.mxu0 %v1193
      %1448 = vmatpush.msra.mxu0 %v1167
      %1449 = vmatpush.msra.mxu0 %v1165
      %1450 = vmatpush.msra.mxu0 %v1163
      %1451 = vmatpush.msra.mxu0 %v1161
      %1452 = vmatmul.f32.gmra.mxu0 %v1297
      %v1453 = vpop.f32.mrf.mxu0
      %v1454 = vadd.f32 %v1425, %v1453
      %1455 = vmatmul.f32.gmra.mxu0 %v1300
      %v1456 = vpop.f32.mrf.mxu0
      %v1457 = vadd.f32 %v1428, %v1456
      %1458 = vmatmul.f32.gmra.mxu0 %v1303
      %v1459 = vpop.f32.mrf.mxu0
      %v1460 = vadd.f32 %v1431, %v1459
      %1461 = vmatmul.f32.gmra.mxu0 %v1306
      %v1462 = vpop.f32.mrf.mxu0
      %v1463 = vadd.f32 %v1434, %v1462
      %1464 = vdwg.mxu0
      %1465 = vmatpush.msra.mxu0 0.0
      %1466 = vmatpush.msra.mxu0 0.0
      %1467 = vmatpush.msra.mxu0 0.0
      %1468 = vmatpush.msra.mxu0 0.0
      %1469 = vmatpush.msra.mxu0 0.0
      %1470 = vmatpush.msra.mxu0 0.0
      %1471 = vmatpush.msra.mxu0 0.0
      %1472 = vmatpush.msra.mxu0 0.0
      %1473 = vmatpush.msra.mxu0 0.0
      %1474 = vmatpush.msra.mxu0 0.0
      %1475 = vmatpush.msra.mxu0 0.0
      %1476 = vmatpush.msra.mxu0 0.0
      %1477 = vmatpush.msra.mxu0 %v1295
      %1478 = vmatpush.msra.mxu0 %v1293
      %1479 = vmatpush.msra.mxu0 %v1291
      %1480 = vmatpush.msra.mxu0 %v1289
      %1481 = vmatmul.f32.gmra.mxu0 %v1309
      %v1482 = vpop.f32.mrf.mxu0
      %v1483 = vadd.f32 %v1454, %v1482
      %1484 = vmatmul.f32.gmra.mxu0 %v1312
      %v1485 = vpop.f32.mrf.mxu0
      %v1486 = vadd.f32 %v1457, %v1485
      %1487 = vmatmul.f32.gmra.mxu0 %v1315
      %v1488 = vpop.f32.mrf.mxu0
      %v1489 = vadd.f32 %v1460, %v1488
      %1490 = vmatmul.f32.gmra.mxu0 %v1318
      %v1491 = vpop.f32.mrf.mxu0
      %v1492 = vadd.f32 %v1463, %v1491
      %1493 = vdwg.mxu0
      %v1494 = vadd.f32 %v1396, %v1483
      %1495 = vadd.xlane.f32.xlu0 %v1494
      %v1496 = vpop.xlane.xlu0 %1495
      %v1497 = vadd.f32 %v1399, %v1486
      %1498 = vadd.xlane.f32.xlu0 %v1497
      %v1499 = vpop.xlane.xlu0 %1498
      %v1500 = vadd.f32 %v1402, %v1489
      %1501 = vadd.xlane.f32.xlu0 %v1500
      %v1502 = vpop.xlane.xlu0 %1501
      %v1503 = vadd.f32 %v1405, %v1492
      %1504 = vadd.xlane.f32.xlu0 %v1503
      %v1505 = vpop.xlane.xlu0 %1504
      %v1506 = vmul.f32 %v1496, %v867
      %v1507 = vmul.f32 %v1499, %v867
      %v1508 = vmul.f32 %v1502, %v867
      %v1509 = vmul.f32 %v1505, %v867
      %v1510 = vmul.f32 %v1396, %v1396
      %v1511 = vmul.f32 %v1483, %v1483
      %v1512 = vmul.f32 %v1399, %v1399
      %v1513 = vmul.f32 %v1486, %v1486
      %v1514 = vmul.f32 %v1402, %v1402
      %v1515 = vmul.f32 %v1489, %v1489
      %v1516 = vmul.f32 %v1405, %v1405
      %v1517 = vmul.f32 %v1492, %v1492
      %v1518 = vadd.f32 %v1510, %v1511
      %1519 = vadd.xlane.f32.xlu0 %v1518
      %v1520 = vpop.xlane.xlu0 %1519
      %v1521 = vadd.f32 %v1512, %v1513
      %1522 = vadd.xlane.f32.xlu0 %v1521
      %v1523 = vpop.xlane.xlu0 %1522
      %v1524 = vadd.f32 %v1514, %v1515
      %1525 = vadd.xlane.f32.xlu0 %v1524
      %v1526 = vpop.xlane.xlu0 %1525
      %v1527 = vadd.f32 %v1516, %v1517
      %1528 = vadd.xlane.f32.xlu0 %v1527
      %v1529 = vpop.xlane.xlu0 %1528
      %v1530 = vmul.f32 %v1520, %v867
      %v1531 = vmul.f32 %v1523, %v867
      %v1532 = vmul.f32 %v1526, %v867
      %v1533 = vmul.f32 %v1529, %v867
      %v1534 = vmul.f32 %v1506, %v1506
      %v1535 = vmul.f32 %v1507, %v1507
      %v1536 = vmul.f32 %v1508, %v1508
      %v1537 = vmul.f32 %v1509, %v1509
      %v1538 = vsub.f32 %v1530, %v1534
      %v1539 = vsub.f32 %v1531, %v1535
      %v1540 = vsub.f32 %v1532, %v1536
      %v1541 = vsub.f32 %v1533, %v1537
      %v1542 = vld [vmem:[%s5] sm:$0xff]
      %v1543 = vld [vmem:[%s5 + $0x8] sm:$0xff]
      %v1544 = vld [vmem:[%s5 + $0x10] sm:$0xff]
      %v1545 = vld [vmem:[%s5 + $0x18] sm:$0xff]
      %v1546 = vadd.f32 %v1538, 1e-05
      %v1547 = vadd.f32 %v1539, 1e-05
      %v1548 = vadd.f32 %v1540, 1e-05
      %v1549 = vadd.f32 %v1541, 1e-05
      %v1550 = vrsqrt.pop %v1546
      %v1551 = vmul.f32 %v1550, %v1546
      %v1552 = vmul.f32 %v1551, %v1550
      %v1553 = vmul.f32 0.5, %v1552
      %v1554 = vsub.f32 1.5, %v1553
      %v1555 = vmul.f32 %v1550, %v1554
      %vm1556 = vweird.f32 %v1546
      %vm1557 = vweird.f32 %v1550
      %vm1558 = vmor %vm1556, %vm1557
      %v1559 = vsel %vm1558, %v1550, %v1555
      %v1560 = vrsqrt.pop %v1547
      %v1561 = vmul.f32 %v1560, %v1547
      %v1562 = vmul.f32 %v1561, %v1560
      %v1563 = vmul.f32 0.5, %v1562
      %v1564 = vsub.f32 1.5, %v1563
      %v1565 = vmul.f32 %v1560, %v1564
      %vm1566 = vweird.f32 %v1547
      %vm1567 = vweird.f32 %v1560
      %vm1568 = vmor %vm1566, %vm1567
      %v1569 = vsel %vm1568, %v1560, %v1565
      %v1570 = vrsqrt.pop %v1548
      %v1571 = vmul.f32 %v1570, %v1548
      %v1572 = vmul.f32 %v1571, %v1570
      %v1573 = vmul.f32 0.5, %v1572
      %v1574 = vsub.f32 1.5, %v1573
      %v1575 = vmul.f32 %v1570, %v1574
      %vm1576 = vweird.f32 %v1548
      %vm1577 = vweird.f32 %v1570
      %vm1578 = vmor %vm1576, %vm1577
      %v1579 = vsel %vm1578, %v1570, %v1575
      %v1580 = vrsqrt.pop %v1549
      %v1581 = vmul.f32 %v1580, %v1549
      %v1582 = vmul.f32 %v1581, %v1580
      %v1583 = vmul.f32 0.5, %v1582
      %v1584 = vsub.f32 1.5, %v1583
      %v1585 = vmul.f32 %v1580, %v1584
      %vm1586 = vweird.f32 %v1549
      %vm1587 = vweird.f32 %v1580
      %vm1588 = vmor %vm1586, %vm1587
      %v1589 = vsel %vm1588, %v1580, %v1585
      %v1590 = vmul.f32 %v1542, %v1559
      %v1591 = vmul.f32 %v1543, %v1569
      %v1592 = vmul.f32 %v1544, %v1579
      %v1593 = vmul.f32 %v1545, %v1589
      %v1594 = vld [vmem:[%s6] sm:$0xff]
      %v1595 = vld [vmem:[%s6 + $0x8] sm:$0xff]
      %v1596 = vld [vmem:[%s6 + $0x10] sm:$0xff]
      %v1597 = vld [vmem:[%s6 + $0x18] sm:$0xff]
      %v1598 = vmul.f32 %v1506, %v1590
      %v1599 = vmul.f32 %v1507, %v1591
      %v1600 = vmul.f32 %v1508, %v1592
      %v1601 = vmul.f32 %v1509, %v1593
      %v1602 = vsub.f32 %v1594, %v1598
      %v1603 = vsub.f32 %v1595, %v1599
      %v1604 = vsub.f32 %v1596, %v1600
      %v1605 = vsub.f32 %v1597, %v1601
      %1607 = vset.pattern.permute.xlu0 0
      %1608 = vperm.xlu0 %1607, %v1590
      %v1609 = vpop.permute.xlu0 %1608
      %1612 = vset.pattern.permute.xlu0 0
      %1613 = vperm.xlu0 %1612, %v1591
      %v1614 = vpop.permute.xlu0 %1613
      %1617 = vset.pattern.permute.xlu0 0
      %1618 = vperm.xlu0 %1617, %v1592
      %v1619 = vpop.permute.xlu0 %1618
      %1622 = vset.pattern.permute.xlu0 0
      %1623 = vperm.xlu0 %1622, %v1593
      %v1624 = vpop.permute.xlu0 %1623
      %v1626 = vmul.f32 %v1396, %v1609
      %v1627 = vmul.f32 %v1483, %v1609
      %v1628 = vmul.f32 %v1399, %v1614
      %v1629 = vmul.f32 %v1486, %v1614
      %v1630 = vmul.f32 %v1402, %v1619
      %v1631 = vmul.f32 %v1489, %v1619
      %v1632 = vmul.f32 %v1405, %v1624
      %v1633 = vmul.f32 %v1492, %v1624
      %1635 = vset.pattern.permute.xlu0 0
      %1636 = vperm.xlu0 %1635, %v1602
      %v1637 = vpop.permute.xlu0 %1636
      %1640 = vset.pattern.permute.xlu0 0
      %1641 = vperm.xlu0 %1640, %v1603
      %v1642 = vpop.permute.xlu0 %1641
      %1645 = vset.pattern.permute.xlu0 0
      %1646 = vperm.xlu0 %1645, %v1604
      %v1647 = vpop.permute.xlu0 %1646
      %1650 = vset.pattern.permute.xlu0 0
      %1651 = vperm.xlu0 %1650, %v1605
      %v1652 = vpop.permute.xlu0 %1651
      %v1654 = vadd.f32 %v1626, %v1637
      %v1655 = vadd.f32 %v1627, %v1637
      %v1656 = vadd.f32 %v1628, %v1642
      %v1657 = vadd.f32 %v1629, %v1642
      %v1658 = vadd.f32 %v1630, %v1647
      %v1659 = vadd.f32 %v1631, %v1647
      %v1660 = vadd.f32 %v1632, %v1652
      %v1661 = vadd.f32 %v1633, %v1652
      %v1662 = vadd.f32 %v306, %v1654
      %v1663 = vadd.f32 %v307, %v1655
      %v1664 = vadd.f32 %v308, %v1656
      %v1665 = vadd.f32 %v309, %v1657
      %v1666 = vadd.f32 %v310, %v1658
      %v1667 = vadd.f32 %v311, %v1659
      %v1668 = vadd.f32 %v312, %v1660
      %v1669 = vadd.f32 %v313, %v1661
      %1670 = vst [vmem:[%s305] sm:$0xff] %v1662
      %1671 = vst [vmem:[%s305 + $0x8] sm:$0xff] %v1663
      %1672 = vst [vmem:[%s305 + $0x10] sm:$0xff] %v1664
      %1673 = vst [vmem:[%s305 + $0x18] sm:$0xff] %v1665
      %1674 = vst [vmem:[%s305 + $0x20] sm:$0xff] %v1666
      %1675 = vst [vmem:[%s305 + $0x28] sm:$0xff] %v1667
      %1676 = vst [vmem:[%s305 + $0x30] sm:$0xff] %v1668
      %1677 = vst [vmem:[%s305 + $0x38] sm:$0xff] %v1669
      %p1678 = scmp.lt.s32.totalorder %s19, 1
      %s1679 = scalar_select %p1678, %s19, 1
      %s1680 = smul.addr %s1679, 8
      %s1681 = smul.addr %s1680, 8
      %s1682 = scalar_lea.vmem %s8, %s1681
      // Predicated region
      $region53: #{residual_block_forward.1} parent=51 // pred_check
        %p1683 = pneg %p210
      $region54: #{residual_block_forward.1} parent=51 // pred_check_branch
        %1685 = sbr.rel (%p1683) target = $region56
      $region55: #{residual_block_forward.1} parent=51 // pred_region
        _
      $region56: #{residual_block_forward.1} parent=51 // pred_fallthru
        _
    $region52: #{residual_block_forward.1} parent=5 // pred_fallthru
      _
    %p1686 = scmp.le.s32.totalorder 2, %s14
    // Predicated region
    $region57: #{residual_block_forward.1} parent=5 // pred_check
      %p1687 = pneg %p1686
    $region58: #{residual_block_forward.1} parent=5 // pred_check_branch
      %1689 = sbr.rel (%p1687) target = $region60
    $region59: #{residual_block_forward.1} parent=5 // pred_region
      %s1690 = ssub.s32 %s14, 2
      // Predicated region
      $region61: #{residual_block_forward.1} parent=59 // pred_check
        %p1691 = pneg %p216
      $region62: #{residual_block_forward.1} parent=59 // pred_check_branch
        %1693 = sbr.rel (%p1691) target = $region64
      $region63: #{residual_block_forward.1} parent=59 // pred_region
        %p1694 = scmp.lt.s32.totalorder %s20, 1
        %s1695 = scalar_select %p1694, %s20, 1
        %s1696 = smul.addr %s1695, 8
        %s1697 = smul.addr %s1696, 8
        %s1698 = scalar_lea.vmem %s8, %s1697
      $region64: #{residual_block_forward.1} parent=59 // pred_fallthru
        _
    $region60: #{residual_block_forward.1} parent=5 // pred_fallthru
      _
  $region6: #{residual_block_forward.1} parent=0 // loop_footer
    %s18 = sadd.s32 1, %s14
  $region7: #{residual_block_forward.1} parent=0 // loop_footer_branch
    %13 = sbr.rel target = $region3
  $region8: #{residual_block_forward.1} parent=0 // loop_exit
    _

</llo_original>
